<compile_context>
chip_gen: v7x
topology: tpu7x:2x2x1
jax: 0.10.0
libtpu: 0.0.40
codegen_flags: <defaults>
</compile_context>

<pallas_src>
import functools

import numpy as np
import jax
import jax.numpy as jnp
from jax.experimental import pallas as pl
from jax.experimental.pallas import tpu as pltpu


# ----------------------------------------------------------------------------
# Host-side helpers (literal ports of PyTorch's interpolate index/weight math)
# ----------------------------------------------------------------------------
def _bilinear_1d(in_size, out_size):
    """F.interpolate(mode='bilinear', align_corners=False) 1-D indices/weights."""
    dst = np.arange(out_size, dtype=np.float64)
    src = (dst + 0.5) * (in_size / out_size) - 0.5
    src = np.maximum(src, 0.0)                          # clamp negative coords
    i0 = np.floor(src).astype(np.int64)
    i1 = i0 + (i0 < in_size - 1).astype(np.int64)
    l1 = (src - i0).astype(np.float32)
    l0 = (1.0 - (src - i0)).astype(np.float32)
    return i0, i1, l0, l1


def _bilinear_matrix(in_size, out_size):
    """(out_size, in_size) row-interpolation matrix for the separable resize."""
    i0, i1, l0, l1 = _bilinear_1d(in_size, out_size)
    m = np.zeros((out_size, in_size), dtype=np.float32)
    rows = np.arange(out_size)
    np.add.at(m, (rows, i0), l0)
    np.add.at(m, (rows, i1), l1)                        # i0 == i1 at the edge -> sums to 1
    return m


def _nearest_indices(in_size, out_size):
    """F.interpolate(mode='nearest') source indices."""
    idx = np.floor(np.arange(out_size, dtype=np.float64) * (in_size / out_size))
    return np.minimum(idx.astype(np.int64), in_size - 1)


def _pick_tile(n, cap=16):
    for t in range(min(n, cap), 0, -1):
        if n % t == 0:
            return t
    return 1


# ----------------------------------------------------------------------------
# Pallas kernels
# ----------------------------------------------------------------------------
def _bilinear_threshold_kernel(m_ref, ry_ref, rxt_ref, out_ref, *,
                               n_per_block, logit_threshold):
    """Per batch element / query tile: bilinear resize + sigmoid>threshold."""
    ry = ry_ref[...]                                     # (max_h, h)
    rxt = rxt_ref[...]                                   # (w, max_w)
    for n in range(n_per_block):                         # static unroll (small tile)
        rows = jnp.dot(ry, m_ref[n], preferred_element_type=jnp.float32)    # (max_h, w)
        logits = jnp.dot(rows, rxt, preferred_element_type=jnp.float32)     # (max_h, max_w)
        # sigmoid(x) > t  <=>  x > logit(t): fold the sigmoid into the compare.
        out_ref[n] = (logits > logit_threshold).astype(jnp.float32)


def _crop_nearest_kernel(m_ref, sy_ref, sxt_ref, out_ref, *, n_per_block):
    """Crop + nearest resize as exact one-hot selection matmuls (a gather)."""
    sy = sy_ref[...]                                     # (out_h, max_h) one-hot rows
    sxt = sxt_ref[...]                                   # (max_w, out_w) one-hot cols
    for n in range(n_per_block):
        rows = jnp.dot(sy, m_ref[n], preferred_element_type=jnp.float32)    # (out_h, max_w)
        out_ref[n] = jnp.dot(rows, sxt, preferred_element_type=jnp.float32) # (out_h, out_w)


# ----------------------------------------------------------------------------
# Wrapper mirroring PostProcessSegm.forward
# ----------------------------------------------------------------------------
def post_process_segm(results, outputs, orig_target_sizes, max_target_sizes,
                      *, threshold=0.5, n_tile=None):
    assert 0.0 < threshold < 1.0
    pred = jnp.asarray(outputs["pred_masks"], dtype=jnp.float32)
    assert pred.ndim == 5 and pred.shape[2] == 1
    B, N, _, h, w = pred.shape
    pred = pred.reshape(B, N, h, w)                      # .squeeze(2)

    # Sizes are concretized on host (the PyTorch module calls .tolist()).
    max_sizes = np.asarray(max_target_sizes).reshape(B, 2)
    orig_sizes = np.asarray(orig_target_sizes).reshape(-1, 2)
    assert len(orig_sizes) == len(max_sizes)
    max_h = int(max_sizes[:, 0].max())
    max_w = int(max_sizes[:, 1].max())

    if n_tile is None:
        n_tile = _pick_tile(N)
    logit_thr = float(np.log(threshold / (1.0 - threshold)))

    ry = jnp.asarray(_bilinear_matrix(h, max_h))                                # (max_h, h)
    rxt = jnp.asarray(np.ascontiguousarray(_bilinear_matrix(w, max_w).T))       # (w, max_w)

    # ---- kernel 1: bilinear upsample to (max_h, max_w) + sigmoid > threshold ----
    bil = functools.partial(_bilinear_threshold_kernel,
                            n_per_block=n_tile, logit_threshold=logit_thr)
    masks = pl.pallas_call(
        bil,
        out_shape=jax.ShapeDtypeStruct((B, N, max_h, max_w), jnp.float32),
        grid_spec=pltpu.PrefetchScalarGridSpec(
            num_scalar_prefetch=0,
            grid=(B, N // n_tile),
            in_specs=[
                pl.BlockSpec((None, n_tile, h, w), lambda b, nt: (b, nt, 0, 0)),
                pl.BlockSpec((max_h, h), lambda b, nt: (0, 0)),
                pl.BlockSpec((w, max_w), lambda b, nt: (0, 0)),
            ],
            out_specs=pl.BlockSpec((None, n_tile, max_h, max_w),
                                   lambda b, nt: (b, nt, 0, 0)),
        ),
        compiler_params=pltpu.CompilerParams(
            dimension_semantics=("parallel", "parallel")),
    )(pred, ry, rxt)                                     # float32 {0,1} masks

    # ---- kernel 2 (per image): crop + nearest resize to the original size ----
    for i in range(len(max_sizes)):
        img_h, img_w = int(max_sizes[i, 0]), int(max_sizes[i, 1])
        out_h, out_w = int(orig_sizes[i, 0]), int(orig_sizes[i, 1])
        iy = _nearest_indices(img_h, out_h)              # indices < img_h <= max_h -> crop is implicit
        ix = _nearest_indices(img_w, out_w)
        sy = np.zeros((out_h, max_h), np.float32)
        sy[np.arange(out_h), iy] = 1.0
        sxt = np.zeros((max_w, out_w), np.float32)
        sxt[ix, np.arange(out_w)] = 1.0

        near = functools.partial(_crop_nearest_kernel, n_per_block=n_tile)
        mi = pl.pallas_call(
            near,
            out_shape=jax.ShapeDtypeStruct((N, out_h, out_w), jnp.float32),
            grid_spec=pltpu.PrefetchScalarGridSpec(
                num_scalar_prefetch=0,
                grid=(N // n_tile,),
                in_specs=[
                    pl.BlockSpec((None, n_tile, max_h, max_w),
                                 lambda nt, i=i: (i, nt, 0, 0)),
                    pl.BlockSpec((out_h, max_h), lambda nt: (0, 0)),
                    pl.BlockSpec((max_w, out_w), lambda nt: (0, 0)),
                ],
                out_specs=pl.BlockSpec((n_tile, out_h, out_w),
                                       lambda nt: (nt, 0, 0)),
            ),
            compiler_params=pltpu.CompilerParams(
                dimension_semantics=("parallel",)),
        )(masks, jnp.asarray(sy), jnp.asarray(sxt))
        # (N, out_h, out_w) float {0,1} -> (N, 1, out_h, out_w) uint8 (= .byte())
        results[i]["masks"] = mi.astype(jnp.uint8)[:, None]
    return results


# ----------------------------------------------------------------------------
# Pure NumPy reference (literal port of the PyTorch forward) for verification
# ----------------------------------------------------------------------------
def _reference_post_process(pred_masks, orig_target_sizes, max_target_sizes, threshold):
    pm = np.asarray(pred_masks, dtype=np.float32)
    B, N = pm.shape[0], pm.shape[1]
    pm = pm.reshape(B, N, pm.shape[-2], pm.shape[-1])
    h, w = pm.shape[-2], pm.shape[-1]
    max_sizes = np.asarray(max_target_sizes).reshape(B, 2)
    orig_sizes = np.asarray(orig_target_sizes).reshape(-1, 2)
    max_h = int(max_sizes[:, 0].max())
    max_w = int(max_sizes[:, 1].max())

    yi0, yi1, yl0, yl1 = _bilinear_1d(h, max_h)
    xi0, xi1, xl0, xl1 = _bilinear_1d(w, max_w)
    rows = (pm[:, :, yi0, :] * yl0[None, None, :, None]
            + pm[:, :, yi1, :] * yl1[None, None, :, None])            # (B,N,max_h,w)
    logits = rows[:, :, :, xi0] * xl0 + rows[:, :, :, xi1] * xl1      # (B,N,max_h,max_w)
    prob = 1.0 / (1.0 + np.exp(-logits.astype(np.float64)))
    masks = prob > threshold

    per_image = []
    for i in range(B):
        ih, iw = int(max_sizes[i, 0]), int(max_sizes[i, 1])
        oh, ow = int(orig_sizes[i, 0]), int(orig_sizes[i, 1])
        iy = _nearest_indices(ih, oh)
        ix = _nearest_indices(iw, ow)
        cur = masks[i, :, :ih, :iw]
        resized = cur[:, iy][:, :, ix].astype(np.uint8)[:, None]      # (N,1,oh,ow)
        cur_p = prob[i, :, :ih, :iw]
        prob_resized = cur_p[:, iy][:, :, ix][:, None]                # (N,1,oh,ow)
        per_image.append((resized, prob_resized))
    return per_image


if __name__ == "__main__":
    B, N, h, w = 2, 8, 16, 16
    key = jax.random.PRNGKey(0)
    pred_masks = jax.random.normal(key, (B, N, 1, h, w), dtype=jnp.float32)

    # padded (network-input) sizes and original image sizes, per image
    max_target_sizes = jnp.array([[28, 32], [32, 24]], dtype=jnp.int32)
    orig_target_sizes = jnp.array([[56, 64], [48, 40]], dtype=jnp.int32)

    results = [{} for _ in range(B)]
    outputs = {"pred_masks": pred_masks}

    results = post_process_segm(results, outputs, orig_target_sizes,
                                max_target_sizes, threshold=0.5)
    for r in results:
        jax.block_until_ready(r["masks"])

    ref = _reference_post_process(pred_masks, orig_target_sizes,
                                  max_target_sizes, 0.5)
    for i, (exp, prob) in enumerate(ref):
        got = np.asarray(results[i]["masks"])
        assert got.shape == exp.shape, (got.shape, exp.shape)
        assert got.dtype == np.uint8
        assert set(np.unique(got).tolist()) <= {0, 1}
        # binary masks must match everywhere except pixels whose probability is
        # very close to the threshold (f32/MXU rounding may flip those ties).
        decided = np.abs(prob - 0.5) > 0.05
        assert np.array_equal(got[decided], exp[decided]), f"image {i}: mask mismatch"
        assert np.mean(got != exp) < 0.05, f"image {i}: too many boundary flips"

    print("KERNEL_OK")
</pallas_src>

<mosaic_0001>
module attributes {stable_mosaic.version = 11 : i64} {
  func.func @_bilinear_threshold_kernel(%arg0: i32, %arg1: i32, %arg2: memref<1x8x16x16xf32, #tpu.memory_space<vmem>>, %arg3: memref<32x16xf32, #tpu.memory_space<vmem>>, %arg4: memref<16x32xf32, #tpu.memory_space<vmem>>, %arg5: memref<1x8x32x32xf32, #tpu.memory_space<vmem>>) attributes {dimension_semantics = [#tpu.dimension_semantics<parallel>, #tpu.dimension_semantics<parallel>], iteration_bounds = array<i64: 2, 1>, scalar_prefetch = 0 : i64, scratch_operands = 0 : i64, tpu.core_type = #tpu.core_type<tc>, window_params = [{transform_indices = @transform_0, window_bounds = array<i64: 1, 8, 16, 16>}, {pipeline_mode = #tpu.pipeline_mode<synchronous>, transform_indices = @transform_1, window_bounds = array<i64: 32, 16>}, {pipeline_mode = #tpu.pipeline_mode<synchronous>, transform_indices = @transform_2, window_bounds = array<i64: 16, 32>}, {transform_indices = @transform_3, window_bounds = array<i64: 1, 8, 32, 32>}]} {
    %c0 = arith.constant 0 : index
    %c0_0 = arith.constant 0 : index
    %0 = vector.load %arg3[%c0, %c0_0] : memref<32x16xf32, #tpu.memory_space<vmem>>, vector<32x16xf32>
    %c0_1 = arith.constant 0 : index
    %c0_2 = arith.constant 0 : index
    %1 = vector.load %arg4[%c0_1, %c0_2] : memref<16x32xf32, #tpu.memory_space<vmem>>, vector<16x32xf32>
    %c0_3 = arith.constant 0 : index
    %c0_4 = arith.constant 0 : index
    %c0_5 = arith.constant 0 : index
    %c0_6 = arith.constant 0 : index
    %2 = vector.load %arg2[%c0_3, %c0_4, %c0_5, %c0_6] : memref<1x8x16x16xf32, #tpu.memory_space<vmem>>, vector<1x1x16x16xf32>
    %3 = vector.shape_cast %2 : vector<1x1x16x16xf32> to vector<16x16xf32>
    %cst = arith.constant dense<0.000000e+00> : vector<32x16xf32>
    %4 = tpu.matmul %0, %3, %cst {dimension_numbers = #tpu.dot_dimension_numbers<[1], [0], [0], [1], [0, 0, 1, 1], [], []>} : vector<32x16xf32>, vector<16x16xf32>, vector<32x16xf32> -> vector<32x16xf32>
    %cst_7 = arith.constant dense<0.000000e+00> : vector<32x32xf32>
    %5 = tpu.matmul %4, %1, %cst_7 {dimension_numbers = #tpu.dot_dimension_numbers<[1], [0], [0], [1], [0, 0, 1, 1], [], []>} : vector<32x16xf32>, vector<16x32xf32>, vector<32x32xf32> -> vector<32x32xf32>
    %cst_8 = arith.constant 0.000000e+00 : f32
    %6 = vector.broadcast %cst_8 : f32 to vector<32x32xf32>
    %7 = arith.cmpf ogt, %5, %6 : vector<32x32xf32>
    %8 = arith.extui %7 : vector<32x32xi1> to vector<32x32xi32>
    %9 = arith.sitofp %8 : vector<32x32xi32> to vector<32x32xf32>
    %c0_9 = arith.constant 0 : index
    %c0_10 = arith.constant 0 : index
    %c0_11 = arith.constant 0 : index
    %c0_12 = arith.constant 0 : index
    %10 = vector.load %arg5[%c0_9, %c0_10, %c0_11, %c0_12] : memref<1x8x32x32xf32, #tpu.memory_space<vmem>>, vector<1x1x32x32xf32>
    %11 = vector.shape_cast %10 : vector<1x1x32x32xf32> to vector<32x32xf32>
    %12 = vector.shape_cast %9 : vector<32x32xf32> to vector<1x1x32x32xf32>
    tpu.vector_store %arg5[%c0_9, %c0_10, %c0_11, %c0_12], %12 {strides = array<i32>} : memref<1x8x32x32xf32, #tpu.memory_space<vmem>>, vector<1x1x32x32xf32>,
    %c0_13 = arith.constant 0 : index
    %c1 = arith.constant 1 : index
    %c0_14 = arith.constant 0 : index
    %c0_15 = arith.constant 0 : index
    %13 = vector.load %arg2[%c0_13, %c1, %c0_14, %c0_15] : memref<1x8x16x16xf32, #tpu.memory_space<vmem>>, vector<1x1x16x16xf32>
    %14 = vector.shape_cast %13 : vector<1x1x16x16xf32> to vector<16x16xf32>
    %cst_16 = arith.constant dense<0.000000e+00> : vector<32x16xf32>
    %15 = tpu.matmul %0, %14, %cst_16 {dimension_numbers = #tpu.dot_dimension_numbers<[1], [0], [0], [1], [0, 0, 1, 1], [], []>} : vector<32x16xf32>, vector<16x16xf32>, vector<32x16xf32> -> vector<32x16xf32>
    %cst_17 = arith.constant dense<0.000000e+00> : vector<32x32xf32>
    %16 = tpu.matmul %15, %1, %cst_17 {dimension_numbers = #tpu.dot_dimension_numbers<[1], [0], [0], [1], [0, 0, 1, 1], [], []>} : vector<32x16xf32>, vector<16x32xf32>, vector<32x32xf32> -> vector<32x32xf32>
    %cst_18 = arith.constant 0.000000e+00 : f32
    %17 = vector.broadcast %cst_18 : f32 to vector<32x32xf32>
    %18 = arith.cmpf ogt, %16, %17 : vector<32x32xf32>
    %19 = arith.extui %18 : vector<32x32xi1> to vector<32x32xi32>
    %20 = arith.sitofp %19 : vector<32x32xi32> to vector<32x32xf32>
    %c0_19 = arith.constant 0 : index
    %c1_20 = arith.constant 1 : index
    %c0_21 = arith.constant 0 : index
    %c0_22 = arith.constant 0 : index
    %21 = vector.load %arg5[%c0_19, %c1_20, %c0_21, %c0_22] : memref<1x8x32x32xf32, #tpu.memory_space<vmem>>, vector<1x1x32x32xf32>
    %22 = vector.shape_cast %21 : vector<1x1x32x32xf32> to vector<32x32xf32>
    %23 = vector.shape_cast %20 : vector<32x32xf32> to vector<1x1x32x32xf32>
    tpu.vector_store %arg5[%c0_19, %c1_20, %c0_21, %c0_22], %23 {strides = array<i32>} : memref<1x8x32x32xf32, #tpu.memory_space<vmem>>, vector<1x1x32x32xf32>,
    %c0_23 = arith.constant 0 : index
    %c2 = arith.constant 2 : index
    %c0_24 = arith.constant 0 : index
    %c0_25 = arith.constant 0 : index
    %24 = vector.load %arg2[%c0_23, %c2, %c0_24, %c0_25] : memref<1x8x16x16xf32, #tpu.memory_space<vmem>>, vector<1x1x16x16xf32>
    %25 = vector.shape_cast %24 : vector<1x1x16x16xf32> to vector<16x16xf32>
    %cst_26 = arith.constant dense<0.000000e+00> : vector<32x16xf32>
    %26 = tpu.matmul %0, %25, %cst_26 {dimension_numbers = #tpu.dot_dimension_numbers<[1], [0], [0], [1], [0, 0, 1, 1], [], []>} : vector<32x16xf32>, vector<16x16xf32>, vector<32x16xf32> -> vector<32x16xf32>
    %cst_27 = arith.constant dense<0.000000e+00> : vector<32x32xf32>
    %27 = tpu.matmul %26, %1, %cst_27 {dimension_numbers = #tpu.dot_dimension_numbers<[1], [0], [0], [1], [0, 0, 1, 1], [], []>} : vector<32x16xf32>, vector<16x32xf32>, vector<32x32xf32> -> vector<32x32xf32>
    %cst_28 = arith.constant 0.000000e+00 : f32
    %28 = vector.broadcast %cst_28 : f32 to vector<32x32xf32>
    %29 = arith.cmpf ogt, %27, %28 : vector<32x32xf32>
    %30 = arith.extui %29 : vector<32x32xi1> to vector<32x32xi32>
    %31 = arith.sitofp %30 : vector<32x32xi32> to vector<32x32xf32>
    %c0_29 = arith.constant 0 : index
    %c2_30 = arith.constant 2 : index
    %c0_31 = arith.constant 0 : index
    %c0_32 = arith.constant 0 : index
    %32 = vector.load %arg5[%c0_29, %c2_30, %c0_31, %c0_32] : memref<1x8x32x32xf32, #tpu.memory_space<vmem>>, vector<1x1x32x32xf32>
    %33 = vector.shape_cast %32 : vector<1x1x32x32xf32> to vector<32x32xf32>
    %34 = vector.shape_cast %31 : vector<32x32xf32> to vector<1x1x32x32xf32>
    tpu.vector_store %arg5[%c0_29, %c2_30, %c0_31, %c0_32], %34 {strides = array<i32>} : memref<1x8x32x32xf32, #tpu.memory_space<vmem>>, vector<1x1x32x32xf32>,
    %c0_33 = arith.constant 0 : index
    %c3 = arith.constant 3 : index
    %c0_34 = arith.constant 0 : index
    %c0_35 = arith.constant 0 : index
    %35 = vector.load %arg2[%c0_33, %c3, %c0_34, %c0_35] : memref<1x8x16x16xf32, #tpu.memory_space<vmem>>, vector<1x1x16x16xf32>
    %36 = vector.shape_cast %35 : vector<1x1x16x16xf32> to vector<16x16xf32>
    %cst_36 = arith.constant dense<0.000000e+00> : vector<32x16xf32>
    %37 = tpu.matmul %0, %36, %cst_36 {dimension_numbers = #tpu.dot_dimension_numbers<[1], [0], [0], [1], [0, 0, 1, 1], [], []>} : vector<32x16xf32>, vector<16x16xf32>, vector<32x16xf32> -> vector<32x16xf32>
    %cst_37 = arith.constant dense<0.000000e+00> : vector<32x32xf32>
    %38 = tpu.matmul %37, %1, %cst_37 {dimension_numbers = #tpu.dot_dimension_numbers<[1], [0], [0], [1], [0, 0, 1, 1], [], []>} : vector<32x16xf32>, vector<16x32xf32>, vector<32x32xf32> -> vector<32x32xf32>
    %cst_38 = arith.constant 0.000000e+00 : f32
    %39 = vector.broadcast %cst_38 : f32 to vector<32x32xf32>
    %40 = arith.cmpf ogt, %38, %39 : vector<32x32xf32>
    %41 = arith.extui %40 : vector<32x32xi1> to vector<32x32xi32>
    %42 = arith.sitofp %41 : vector<32x32xi32> to vector<32x32xf32>
    %c0_39 = arith.constant 0 : index
    %c3_40 = arith.constant 3 : index
    %c0_41 = arith.constant 0 : index
    %c0_42 = arith.constant 0 : index
    %43 = vector.load %arg5[%c0_39, %c3_40, %c0_41, %c0_42] : memref<1x8x32x32xf32, #tpu.memory_space<vmem>>, vector<1x1x32x32xf32>
    %44 = vector.shape_cast %43 : vector<1x1x32x32xf32> to vector<32x32xf32>
    %45 = vector.shape_cast %42 : vector<32x32xf32> to vector<1x1x32x32xf32>
    tpu.vector_store %arg5[%c0_39, %c3_40, %c0_41, %c0_42], %45 {strides = array<i32>} : memref<1x8x32x32xf32, #tpu.memory_space<vmem>>, vector<1x1x32x32xf32>,
    %c0_43 = arith.constant 0 : index
    %c4 = arith.constant 4 : index
    %c0_44 = arith.constant 0 : index
    %c0_45 = arith.constant 0 : index
    %46 = vector.load %arg2[%c0_43, %c4, %c0_44, %c0_45] : memref<1x8x16x16xf32, #tpu.memory_space<vmem>>, vector<1x1x16x16xf32>
    %47 = vector.shape_cast %46 : vector<1x1x16x16xf32> to vector<16x16xf32>
    %cst_46 = arith.constant dense<0.000000e+00> : vector<32x16xf32>
    %48 = tpu.matmul %0, %47, %cst_46 {dimension_numbers = #tpu.dot_dimension_numbers<[1], [0], [0], [1], [0, 0, 1, 1], [], []>} : vector<32x16xf32>, vector<16x16xf32>, vector<32x16xf32> -> vector<32x16xf32>
    %cst_47 = arith.constant dense<0.000000e+00> : vector<32x32xf32>
    %49 = tpu.matmul %48, %1, %cst_47 {dimension_numbers = #tpu.dot_dimension_numbers<[1], [0], [0], [1], [0, 0, 1, 1], [], []>} : vector<32x16xf32>, vector<16x32xf32>, vector<32x32xf32> -> vector<32x32xf32>
    %cst_48 = arith.constant 0.000000e+00 : f32
    %50 = vector.broadcast %cst_48 : f32 to vector<32x32xf32>
    %51 = arith.cmpf ogt, %49, %50 : vector<32x32xf32>
    %52 = arith.extui %51 : vector<32x32xi1> to vector<32x32xi32>
    %53 = arith.sitofp %52 : vector<32x32xi32> to vector<32x32xf32>
    %c0_49 = arith.constant 0 : index
    %c4_50 = arith.constant 4 : index
    %c0_51 = arith.constant 0 : index
    %c0_52 = arith.constant 0 : index
    %54 = vector.load %arg5[%c0_49, %c4_50, %c0_51, %c0_52] : memref<1x8x32x32xf32, #tpu.memory_space<vmem>>, vector<1x1x32x32xf32>
    %55 = vector.shape_cast %54 : vector<1x1x32x32xf32> to vector<32x32xf32>
    %56 = vector.shape_cast %53 : vector<32x32xf32> to vector<1x1x32x32xf32>
    tpu.vector_store %arg5[%c0_49, %c4_50, %c0_51, %c0_52], %56 {strides = array<i32>} : memref<1x8x32x32xf32, #tpu.memory_space<vmem>>, vector<1x1x32x32xf32>,
    %c0_53 = arith.constant 0 : index
    %c5 = arith.constant 5 : index
    %c0_54 = arith.constant 0 : index
    %c0_55 = arith.constant 0 : index
    %57 = vector.load %arg2[%c0_53, %c5, %c0_54, %c0_55] : memref<1x8x16x16xf32, #tpu.memory_space<vmem>>, vector<1x1x16x16xf32>
    %58 = vector.shape_cast %57 : vector<1x1x16x16xf32> to vector<16x16xf32>
    %cst_56 = arith.constant dense<0.000000e+00> : vector<32x16xf32>
    %59 = tpu.matmul %0, %58, %cst_56 {dimension_numbers = #tpu.dot_dimension_numbers<[1], [0], [0], [1], [0, 0, 1, 1], [], []>} : vector<32x16xf32>, vector<16x16xf32>, vector<32x16xf32> -> vector<32x16xf32>
    %cst_57 = arith.constant dense<0.000000e+00> : vector<32x32xf32>
    %60 = tpu.matmul %59, %1, %cst_57 {dimension_numbers = #tpu.dot_dimension_numbers<[1], [0], [0], [1], [0, 0, 1, 1], [], []>} : vector<32x16xf32>, vector<16x32xf32>, vector<32x32xf32> -> vector<32x32xf32>
    %cst_58 = arith.constant 0.000000e+00 : f32
    %61 = vector.broadcast %cst_58 : f32 to vector<32x32xf32>
    %62 = arith.cmpf ogt, %60, %61 : vector<32x32xf32>
    %63 = arith.extui %62 : vector<32x32xi1> to vector<32x32xi32>
    %64 = arith.sitofp %63 : vector<32x32xi32> to vector<32x32xf32>
    %c0_59 = arith.constant 0 : index
    %c5_60 = arith.constant 5 : index
    %c0_61 = arith.constant 0 : index
    %c0_62 = arith.constant 0 : index
    %65 = vector.load %arg5[%c0_59, %c5_60, %c0_61, %c0_62] : memref<1x8x32x32xf32, #tpu.memory_space<vmem>>, vector<1x1x32x32xf32>
    %66 = vector.shape_cast %65 : vector<1x1x32x32xf32> to vector<32x32xf32>
    %67 = vector.shape_cast %64 : vector<32x32xf32> to vector<1x1x32x32xf32>
    tpu.vector_store %arg5[%c0_59, %c5_60, %c0_61, %c0_62], %67 {strides = array<i32>} : memref<1x8x32x32xf32, #tpu.memory_space<vmem>>, vector<1x1x32x32xf32>,
    %c0_63 = arith.constant 0 : index
    %c6 = arith.constant 6 : index
    %c0_64 = arith.constant 0 : index
    %c0_65 = arith.constant 0 : index
    %68 = vector.load %arg2[%c0_63, %c6, %c0_64, %c0_65] : memref<1x8x16x16xf32, #tpu.memory_space<vmem>>, vector<1x1x16x16xf32>
    %69 = vector.shape_cast %68 : vector<1x1x16x16xf32> to vector<16x16xf32>
    %cst_66 = arith.constant dense<0.000000e+00> : vector<32x16xf32>
    %70 = tpu.matmul %0, %69, %cst_66 {dimension_numbers = #tpu.dot_dimension_numbers<[1], [0], [0], [1], [0, 0, 1, 1], [], []>} : vector<32x16xf32>, vector<16x16xf32>, vector<32x16xf32> -> vector<32x16xf32>
    %cst_67 = arith.constant dense<0.000000e+00> : vector<32x32xf32>
    %71 = tpu.matmul %70, %1, %cst_67 {dimension_numbers = #tpu.dot_dimension_numbers<[1], [0], [0], [1], [0, 0, 1, 1], [], []>} : vector<32x16xf32>, vector<16x32xf32>, vector<32x32xf32> -> vector<32x32xf32>
    %cst_68 = arith.constant 0.000000e+00 : f32
    %72 = vector.broadcast %cst_68 : f32 to vector<32x32xf32>
    %73 = arith.cmpf ogt, %71, %72 : vector<32x32xf32>
    %74 = arith.extui %73 : vector<32x32xi1> to vector<32x32xi32>
    %75 = arith.sitofp %74 : vector<32x32xi32> to vector<32x32xf32>
    %c0_69 = arith.constant 0 : index
    %c6_70 = arith.constant 6 : index
    %c0_71 = arith.constant 0 : index
    %c0_72 = arith.constant 0 : index
    %76 = vector.load %arg5[%c0_69, %c6_70, %c0_71, %c0_72] : memref<1x8x32x32xf32, #tpu.memory_space<vmem>>, vector<1x1x32x32xf32>
    %77 = vector.shape_cast %76 : vector<1x1x32x32xf32> to vector<32x32xf32>
    %78 = vector.shape_cast %75 : vector<32x32xf32> to vector<1x1x32x32xf32>
    tpu.vector_store %arg5[%c0_69, %c6_70, %c0_71, %c0_72], %78 {strides = array<i32>} : memref<1x8x32x32xf32, #tpu.memory_space<vmem>>, vector<1x1x32x32xf32>,
    %c0_73 = arith.constant 0 : index
    %c7 = arith.constant 7 : index
    %c0_74 = arith.constant 0 : index
    %c0_75 = arith.constant 0 : index
    %79 = vector.load %arg2[%c0_73, %c7, %c0_74, %c0_75] : memref<1x8x16x16xf32, #tpu.memory_space<vmem>>, vector<1x1x16x16xf32>
    %80 = vector.shape_cast %79 : vector<1x1x16x16xf32> to vector<16x16xf32>
    %cst_76 = arith.constant dense<0.000000e+00> : vector<32x16xf32>
    %81 = tpu.matmul %0, %80, %cst_76 {dimension_numbers = #tpu.dot_dimension_numbers<[1], [0], [0], [1], [0, 0, 1, 1], [], []>} : vector<32x16xf32>, vector<16x16xf32>, vector<32x16xf32> -> vector<32x16xf32>
    %cst_77 = arith.constant dense<0.000000e+00> : vector<32x32xf32>
    %82 = tpu.matmul %81, %1, %cst_77 {dimension_numbers = #tpu.dot_dimension_numbers<[1], [0], [0], [1], [0, 0, 1, 1], [], []>} : vector<32x16xf32>, vector<16x32xf32>, vector<32x32xf32> -> vector<32x32xf32>
    %cst_78 = arith.constant 0.000000e+00 : f32
    %83 = vector.broadcast %cst_78 : f32 to vector<32x32xf32>
    %84 = arith.cmpf ogt, %82, %83 : vector<32x32xf32>
    %85 = arith.extui %84 : vector<32x32xi1> to vector<32x32xi32>
    %86 = arith.sitofp %85 : vector<32x32xi32> to vector<32x32xf32>
    %c0_79 = arith.constant 0 : index
    %c7_80 = arith.constant 7 : index
    %c0_81 = arith.constant 0 : index
    %c0_82 = arith.constant 0 : index
    %87 = vector.load %arg5[%c0_79, %c7_80, %c0_81, %c0_82] : memref<1x8x32x32xf32, #tpu.memory_space<vmem>>, vector<1x1x32x32xf32>
    %88 = vector.shape_cast %87 : vector<1x1x32x32xf32> to vector<32x32xf32>
    %89 = vector.shape_cast %86 : vector<32x32xf32> to vector<1x1x32x32xf32>
    tpu.vector_store %arg5[%c0_79, %c7_80, %c0_81, %c0_82], %89 {strides = array<i32>} : memref<1x8x32x32xf32, #tpu.memory_space<vmem>>, vector<1x1x32x32xf32>,
    return
  }
  func.func @transform_0(%arg0: i32, %arg1: i32) -> (i32, i32, i32, i32) {
    %c0_i32 = arith.constant 0 : i32
    %c0_i32_0 = arith.constant 0 : i32
    %c0_i32_1 = arith.constant 0 : i32
    return %arg0, %arg1, %c0_i32, %c0_i32_0 : i32, i32, i32, i32
  }
  func.func @transform_1(%arg0: i32, %arg1: i32) -> (i32, i32) {
    %c0_i32 = arith.constant 0 : i32
    %c0_i32_0 = arith.constant 0 : i32
    %c0_i32_1 = arith.constant 0 : i32
    return %c0_i32, %c0_i32_0 : i32, i32
  }
  func.func @transform_2(%arg0: i32, %arg1: i32) -> (i32, i32) {
    %c0_i32 = arith.constant 0 : i32
    %c0_i32_0 = arith.constant 0 : i32
    %c0_i32_1 = arith.constant 0 : i32
    return %c0_i32, %c0_i32_0 : i32, i32
  }
  func.func @transform_3(%arg0: i32, %arg1: i32) -> (i32, i32, i32, i32) {
    %c0_i32 = arith.constant 0 : i32
    %c0_i32_0 = arith.constant 0 : i32
    %c0_i32_1 = arith.constant 0 : i32
    return %arg0, %arg1, %c0_i32, %c0_i32_0 : i32, i32, i32, i32
  }
}

</mosaic_0001>

<llo_original>
// kernel: tpu_custom_call.1
$region0: #{tpu_custom_call.1}
  #allocation0 [shape = 'u32[]', space=smem, size = 0x4, offset = 0x4, fixed_abs, tag = 'smem constant byte address 0x4 - core index']
  #allocation1 [shape = 'u32[144,128]{1,0:T(1,128)}', space=vmem, size = 0x12000, scoped, tag = 'internal scratch']
  %s0 = inlined_call_operand.hbm [shape: f32[2,8,16,16], index: 0, kind: input, shape index: {}]
  %s1 = inlined_call_operand.vmem [shape: f32[32,16], index: 1, kind: input, shape index: {}]
  %s2 = inlined_call_operand.vmem [shape: f32[16,32], index: 2, kind: input, shape index: {}]
  %s3 = inlined_call_operand.hbm [shape: f32[2,8,32,32], index: 3, kind: output, shape index: {}]
  %s4 = sld [smem:[#allocation0]]
  $region49: #{tpu_custom_call.1} parent=0
    _
  %s6 = ssub.s32 1, %s4
  %s7 = scalar_select 0, %s6, %s4
  $region1: #{tpu_custom_call.1} parent=0
    #allocation2 [shape = 'u8[131072]{0}', space=vmem, size = 0x20000, scoped, tag = 'input window, operand 0']
    #allocation3 [shape = 's32[2]{0}', space=sflag, size = 0x8, scoped, tag = 'scoped memory for tpu_custom_call.1']
    #allocation4 [shape = 's32[2]{0}', space=sflag, size = 0x8, scoped, tag = 'scoped memory for tpu_custom_call.1']
    #allocation5 [shape = 'u8[262144]{0}', space=vmem, size = 0x40000, scoped, tag = 'output window, operand 0']
    %8 = vsyncpa [#allocation3], 0
    %s9 = scalar_lea.sflag [#allocation3], 1
    %10 = vsyncpa %s9, 0
    %11 = vsyncpa [#allocation4], 0
    %s12 = scalar_lea.sflag [#allocation4], 1
    %13 = vsyncpa %s12, 0
    loop: start=0, step=1, limit=4
    $region2: #{tpu_custom_call.1} parent=1 // loop_pre_header
      _
    $region3: #{tpu_custom_call.1} parent=1 // loop_header
      %s15 = sphi 0, %s19
      %p16 = scmp.ge.s32.totalorder %s15, 4
      %s22 = sphi 0, %s34
      %s23 = sphi 0, %s30
      %s24 = sphi 0, %s22
      %s25 = sphi 0, %s23
      %s26 = sphi 0, %s24
      %s27 = sphi 0, %s25
      %s39 = sphi 0, %s41
      %s42 = sphi 0, %s39
      %s43 = sphi 0, %s42
      %s59 = sphi 0, %s43
      %s63 = sphi 0, %s63
      %s65 = sphi 0, %s63
      %s66 = sphi 0, %s65
      %s80 = sphi 0, %s66
      %s84 = sphi 0, %s84
      %s86 = sphi 0, %s84
      %s87 = sphi 0, %s86
      %s101 = sphi 0, %s87
      %s109 = sphi 0, %s111
      %s112 = sphi 0, %s109
      %s113 = sphi 0, %s112
      %s129 = sphi 0, %s113
    $region4: #{tpu_custom_call.1} parent=1 // loop_header_branch
      %18 = sbr.rel (%p16) target = $region8
    $region5: #{tpu_custom_call.1} parent=1 // loop_body
      %s20 = ssub.s32 %s15, 1
      %s21 = ssub.s32 %s15, 2
      %s28 = sadd.s32 1, %s23
      %p29 = scmp.ge.s32.totalorder %s28, 1
      %s30 = scalar_select %p29, 0, %s28
      %s31 = sadd.s32 1, %s22
      %s32 = scalar_select %p29, %s31, %s22
      %p33 = scmp.ge.s32.totalorder %s32, 2
      %s34 = scalar_select %p33, 0, %s32
      %s35 = ssub.s32 %s22, %s34
      %s36 = ssub.s32 %s23, %s30
      %s37 = sor.u32 %s35, %s36
      %p38 = scmp.eq.s32.totalorder %s37, 0
      %s40 = sadd.s32 %s39, 1
      %s41 = scalar_select %p38, %s39, %s40
      %p44 = pneg %p38
      %p45 = scmp.eq.s32.totalorder %s15, 1
      %p46 = por %p44, %p45
      %p47 = scmp.ne.s32.totalorder %s39, %s42
      %p48 = scmp.eq.s32.totalorder %s15, 0
      %p49 = por %p47, %p48
      %p50 = scmp.ne.s32.totalorder %s39, %s42
      %p51 = scmp.eq.s32.totalorder %s20, 1
      %p52 = por %p50, %p51
      %p53 = scmp.ne.s32.totalorder %s42, %s43
      %p54 = scmp.eq.s32.totalorder %s20, 0
      %p55 = por %p53, %p54
      %p56 = scmp.ne.s32.totalorder %s42, %s43
      %p57 = scmp.eq.s32.totalorder %s21, 1
      %p58 = por %p56, %p57
      %p60 = scmp.ne.s32.totalorder %s43, %s59
      %p61 = scmp.eq.s32.totalorder %s21, 0
      %p62 = por %p60, %p61
      %s64 = sadd.s32 %s63, 1
      %p67 = scmp.eq.s32.totalorder %s15, 1
      %p68 = scmp.ne.s32.totalorder %s63, %s65
      %p69 = scmp.eq.s32.totalorder %s15, 0
      %p70 = por %p68, %p69
      %p71 = scmp.ne.s32.totalorder %s63, %s65
      %p72 = scmp.eq.s32.totalorder %s20, 1
      %p73 = por %p71, %p72
      %p74 = scmp.ne.s32.totalorder %s65, %s66
      %p75 = scmp.eq.s32.totalorder %s20, 0
      %p76 = por %p74, %p75
      %p77 = scmp.ne.s32.totalorder %s65, %s66
      %p78 = scmp.eq.s32.totalorder %s21, 1
      %p79 = por %p77, %p78
      %p81 = scmp.ne.s32.totalorder %s66, %s80
      %p82 = scmp.eq.s32.totalorder %s21, 0
      %p83 = por %p81, %p82
      %s85 = sadd.s32 %s84, 1
      %p88 = scmp.eq.s32.totalorder %s15, 1
      %p89 = scmp.ne.s32.totalorder %s84, %s86
      %p90 = scmp.eq.s32.totalorder %s15, 0
      %p91 = por %p89, %p90
      %p92 = scmp.ne.s32.totalorder %s84, %s86
      %p93 = scmp.eq.s32.totalorder %s20, 1
      %p94 = por %p92, %p93
      %p95 = scmp.ne.s32.totalorder %s86, %s87
      %p96 = scmp.eq.s32.totalorder %s20, 0
      %p97 = por %p95, %p96
      %p98 = scmp.ne.s32.totalorder %s86, %s87
      %p99 = scmp.eq.s32.totalorder %s21, 1
      %p100 = por %p98, %p99
      %p102 = scmp.ne.s32.totalorder %s87, %s101
      %p103 = scmp.eq.s32.totalorder %s21, 0
      %p104 = por %p102, %p103
      %s105 = ssub.s32 %s22, %s34
      %s106 = ssub.s32 %s23, %s30
      %s107 = sor.u32 %s105, %s106
      %p108 = scmp.eq.s32.totalorder %s107, 0
      %s110 = sadd.s32 %s109, 1
      %s111 = scalar_select %p108, %s109, %s110
      %p114 = pneg %p108
      %p115 = scmp.eq.s32.totalorder %s15, 1
      %p116 = por %p114, %p115
      %p117 = scmp.ne.s32.totalorder %s109, %s112
      %p118 = scmp.eq.s32.totalorder %s15, 0
      %p119 = por %p117, %p118
      %p120 = scmp.ne.s32.totalorder %s109, %s112
      %p121 = scmp.eq.s32.totalorder %s20, 1
      %p122 = por %p120, %p121
      %p123 = scmp.ne.s32.totalorder %s112, %s113
      %p124 = scmp.eq.s32.totalorder %s20, 0
      %p125 = por %p123, %p124
      %p126 = scmp.ne.s32.totalorder %s112, %s113
      %p127 = scmp.eq.s32.totalorder %s21, 1
      %p128 = por %p126, %p127
      %p130 = scmp.ne.s32.totalorder %s113, %s129
      %p131 = scmp.eq.s32.totalorder %s21, 0
      %p132 = por %p130, %p131
      %p133 = scmp.le.s32.totalorder 1, %s15
      %p134 = scmp.lt.s32.totalorder %s15, 3
      %p135 = pnand %p133, %p134
      %p136 = pneg %p135
      // Predicated region
      $region9: #{tpu_custom_call.1} parent=5 // pred_check
        _
      $region10: #{tpu_custom_call.1} parent=5 // pred_check_branch
        %138 = sbr.rel (%p135) target = $region12
      $region11: #{tpu_custom_call.1} parent=5 // pred_region
        %s139 = ssub.s32 %s15, 1
        // Predicated region
        $region13: #{tpu_custom_call.1} parent=11 // pred_check
          %p140 = pneg %p76
        $region14: #{tpu_custom_call.1} parent=11 // pred_check_branch
          %142 = sbr.rel (%p140) target = $region16
        $region15: #{tpu_custom_call.1} parent=11 // pred_region
          _
        $region16: #{tpu_custom_call.1} parent=11 // pred_fallthru
          _
        // Predicated region
        $region17: #{tpu_custom_call.1} parent=11 // pred_check
          %p143 = pneg %p97
        $region18: #{tpu_custom_call.1} parent=11 // pred_check_branch
          %145 = sbr.rel (%p143) target = $region20
        $region19: #{tpu_custom_call.1} parent=11 // pred_region
          _
        $region20: #{tpu_custom_call.1} parent=11 // pred_fallthru
          _
      $region12: #{tpu_custom_call.1} parent=5 // pred_fallthru
        _
      %p146 = scmp.lt.s32.totalorder %s15, 2
      // Predicated region
      $region21: #{tpu_custom_call.1} parent=5 // pred_check
        %p147 = pneg %p146
      $region22: #{tpu_custom_call.1} parent=5 // pred_check_branch
        %149 = sbr.rel (%p147) target = $region24
      $region23: #{tpu_custom_call.1} parent=5 // pred_region
        // Predicated region
        $region25: #{tpu_custom_call.1} parent=23 // pred_check
          %p150 = pneg %p49
        $region26: #{tpu_custom_call.1} parent=23 // pred_check_branch
          %152 = sbr.rel (%p150) target = $region28
        $region27: #{tpu_custom_call.1} parent=23 // pred_region
          %s153 = sand.u32 %s39, 1
          %s154 = scalar_lea.sflag [#allocation3], %s153
          %s155 = sand.u32 %s39, 1
          %s156 = smul.addr %s155, 128
          %s157 = scalar_lea.vmem [#allocation2], %s156
          %s158 = smul.u32 8, %s23
          %s160 = ssub.s32 2048, 2048
          %161 = vsyncadd %s154, %s160
          %s162 = smul.addr %s158, 2
          %s163 = smul.addr %s22, 16
          %s164 = sadd.s32 %s162, %s163
          %s165 = smul.addr %s164, 128
          %s166 = scalar_lea.hbm %s0, %s165
          %s167 = sshll.u32 %s157, 4
          %s168 = int_to_ptr.vmem [resolvable:$true] %s167
          %173 = dma.hbm_to_vmem [thread:$0]  %s166, 2048, %s168, %s154, 128, 128, 8
        $region28: #{tpu_custom_call.1} parent=23 // pred_fallthru
          _
      $region24: #{tpu_custom_call.1} parent=5 // pred_fallthru
        _
      %p174 = scmp.le.s32.totalorder 1, %s15
      %p175 = scmp.lt.s32.totalorder %s15, 3
      %p176 = pnand %p174, %p175
      %p177 = pneg %p176
      // Predicated region
      $region29: #{tpu_custom_call.1} parent=5 // pred_check
        _
      $region30: #{tpu_custom_call.1} parent=5 // pred_check_branch
        %179 = sbr.rel (%p176) target = $region32
      $region31: #{tpu_custom_call.1} parent=5 // pred_region
        %s180 = ssub.s32 %s15, 1
        %s181 = sand.u32 %s42, 1
        %s182 = scalar_lea.sflag [#allocation3], %s181
        %s183 = sand.u32 %s42, 1
        %s184 = smul.addr %s183, 128
        %s185 = scalar_lea.vmem [#allocation2], %s184
        // Predicated region
        $region33: #{tpu_custom_call.1} parent=31 // pred_check
          %p186 = pneg %p55
        $region34: #{tpu_custom_call.1} parent=31 // pred_check_branch
          %188 = sbr.rel (%p186) target = $region36
        $region35: #{tpu_custom_call.1} parent=31 // pred_region
          %189 = dma.done %s182, 2048
        $region36: #{tpu_custom_call.1} parent=31 // pred_fallthru
          _
        %s190 = sand.u32 %s42, 1
        %s191 = scalar_lea.sflag [#allocation3], %s190
        %s192 = sand.u32 %s42, 1
        %s193 = smul.addr %s192, 128
        %s194 = scalar_lea.vmem [#allocation2], %s193
        %p195 = pneg %p55
        %p196 = pneg %p52
        %p197 = pneg %p76
        %p198 = pneg %p73
        %p199 = pneg %p97
        %p200 = pneg %p94
        %p201 = pneg %p125
        %p202 = pneg %p122
        %s203 = sand.u32 %s112, 1
        %s204 = scalar_lea.sflag [#allocation4], %s203
        %s205 = sand.u32 %s112, 1
        %s206 = smul.addr %s205, 256
        %s207 = scalar_lea.vmem [#allocation5], %s206
        %s208 = smul.u32 8, %s25
        %s209 = smul.u32 8, %s25
        %v210 = vld [vmem:[%s1] sm:$0xff]
        %v211 = vld [vmem:[%s1 + $0x8] sm:$0xff]
        %v212 = vld [vmem:[%s1 + $0x10] sm:$0xff]
        %v213 = vld [vmem:[%s1 + $0x18] sm:$0xff]
        %v214 = vld [vmem:[%s2] sm:$0xff]
        %v215 = vld [vmem:[%s2 + $0x8] sm:$0xff]
        %v216 = vld [vmem:[%s185] sm:$0xff]
        %v217 = vld [vmem:[%s185 + $0x8] sm:$0xff]
        %vm218 = vcmask 130048
        %v220 = vsel %vm218, %v210, 0
        %v223 = vsel %vm218, %v211, 0
        %v226 = vsel %vm218, %v212, 0
        %v229 = vsel %vm218, %v213, 0
        %231 = vmatprep.subr.mxu0 0.0
        %232 = vmatpush1.msra.mxu0 %v216
        %233 = vmatprep.subr.mxu0 0.0
        %234 = vmatpush1.msra.mxu0 %v217
        %235 = vmatprep.subr.mxu0 0.0
        %236 = vmatpush1.msra.mxu0 0.0
        %237 = vmatprep.subr.mxu0 0.0
        %238 = vmatpush1.msra.mxu0 0.0
        %239 = vmatprep.subr.mxu0 0.0
        %240 = vmatpush1.msra.mxu0 0.0
        %241 = vmatprep.subr.mxu0 0.0
        %242 = vmatpush1.msra.mxu0 0.0
        %243 = vmatprep.subr.mxu0 0.0
        %244 = vmatpush1.msra.mxu0 0.0
        %245 = vmatprep.subr.mxu0 0.0
        %246 = vmatpush1.msra.mxu0 0.0
        %247 = vmatprep.subr.mxu0 0.0
        %248 = vmatpush1.msra.mxu0 0.0
        %249 = vmatprep.subr.mxu0 0.0
        %250 = vmatpush1.msra.mxu0 0.0
        %251 = vmatprep.subr.mxu0 0.0
        %252 = vmatpush1.msra.mxu0 0.0
        %253 = vmatprep.subr.mxu0 0.0
        %254 = vmatpush1.msra.mxu0 0.0
        %255 = vmatprep.subr.mxu0 0.0
        %256 = vmatpush1.msra.mxu0 0.0
        %257 = vmatprep.subr.mxu0 0.0
        %258 = vmatpush1.msra.mxu0 0.0
        %259 = vmatprep.subr.mxu0 0.0
        %260 = vmatpush1.msra.mxu0 0.0
        %261 = vmatprep.subr.mxu0 0.0
        %262 = vmatpush1.msra.mxu0 0.0
        %263 = vmatprep.subr.mxu0 0.0
        %264 = vmatpush1.msra.mxu0 0.0
        %265 = vmatprep.subr.mxu0 0.0
        %266 = vmatpush1.msra.mxu0 0.0
        %267 = vmatprep.subr.mxu0 0.0
        %268 = vmatpush1.msra.mxu0 0.0
        %269 = vmatprep.subr.mxu0 0.0
        %270 = vmatpush1.msra.mxu0 0.0
        %271 = vmatprep.subr.mxu0 0.0
        %272 = vmatpush1.msra.mxu0 0.0
        %273 = vmatprep.subr.mxu0 0.0
        %274 = vmatpush1.msra.mxu0 0.0
        %275 = vmatprep.subr.mxu0 0.0
        %276 = vmatpush1.msra.mxu0 0.0
        %277 = vmatprep.subr.mxu0 0.0
        %278 = vmatpush1.msra.mxu0 0.0
        %279 = vmatprep.subr.mxu0 0.0
        %280 = vmatpush1.msra.mxu0 0.0
        %281 = vmatprep.subr.mxu0 0.0
        %282 = vmatpush1.msra.mxu0 0.0
        %283 = vmatprep.subr.mxu0 0.0
        %284 = vmatpush1.msra.mxu0 0.0
        %285 = vmatprep.subr.mxu0 0.0
        %286 = vmatpush1.msra.mxu0 0.0
        %287 = vmatprep.subr.mxu0 0.0
        %288 = vmatpush1.msra.mxu0 0.0
        %289 = vmatprep.subr.mxu0 0.0
        %290 = vmatpush1.msra.mxu0 0.0
        %291 = vmatprep.subr.mxu0 0.0
        %292 = vmatpush1.msra.mxu0 0.0
        %293 = vmatprep.subr.mxu0 0.0
        %294 = vmatpush1.msra.mxu0 0.0
        %295 = vmatprep.mubr.f32.mxu0 0.0
        %296 = vmatmul.mubr.f32.gmra.mrb[0].mxu0 %v220
        %v297 = vpop.f32.mrb[0].mxu0
        %v298 = vadd.f32 0.0, %v297
        %v299 = vpop.f32.mrb[0].mxu0
        %300 = vmatprep.mubr.f32.mxu0 0.0
        %301 = vmatmul.mubr.f32.gmra.mrb[0].mxu0 %v223
        %v302 = vpop.f32.mrb[0].mxu0
        %v303 = vadd.f32 0.0, %v302
        %v304 = vpop.f32.mrb[0].mxu0
        %305 = vmatprep.mubr.f32.mxu0 0.0
        %306 = vmatmul.mubr.f32.gmra.mrb[0].mxu0 %v226
        %v307 = vpop.f32.mrb[0].mxu0
        %v308 = vadd.f32 0.0, %v307
        %v309 = vpop.f32.mrb[0].mxu0
        %310 = vmatprep.mubr.f32.mxu0 0.0
        %311 = vmatmul.mubr.f32.gmra.mrb[0].mxu0 %v229
        %v312 = vpop.f32.mrb[0].mxu0
        %v313 = vadd.f32 0.0, %v312
        %v314 = vpop.f32.mrb[0].mxu0
        %315 = vdwg.mxu0
        %v317 = vsel %vm218, %v298, 0
        %v320 = vsel %vm218, %v303, 0
        %v323 = vsel %vm218, %v308, 0
        %v326 = vsel %vm218, %v313, 0
        %328 = vmatprep.subr.mxu0 0.0
        %329 = vmatpush1.msra.mxu0 %v214
        %330 = vmatprep.subr.mxu0 0.0
        %331 = vmatpush1.msra.mxu0 %v215
        %332 = vmatprep.subr.mxu0 0.0
        %333 = vmatpush1.msra.mxu0 0.0
        %334 = vmatprep.subr.mxu0 0.0
        %335 = vmatpush1.msra.mxu0 0.0
        %336 = vmatprep.subr.mxu0 0.0
        %337 = vmatpush1.msra.mxu0 0.0
        %338 = vmatprep.subr.mxu0 0.0
        %339 = vmatpush1.msra.mxu0 0.0
        %340 = vmatprep.subr.mxu0 0.0
        %341 = vmatpush1.msra.mxu0 0.0
        %342 = vmatprep.subr.mxu0 0.0
        %343 = vmatpush1.msra.mxu0 0.0
        %344 = vmatprep.subr.mxu0 0.0
        %345 = vmatpush1.msra.mxu0 0.0
        %346 = vmatprep.subr.mxu0 0.0
        %347 = vmatpush1.msra.mxu0 0.0
        %348 = vmatprep.subr.mxu0 0.0
        %349 = vmatpush1.msra.mxu0 0.0
        %350 = vmatprep.subr.mxu0 0.0
        %351 = vmatpush1.msra.mxu0 0.0
        %352 = vmatprep.subr.mxu0 0.0
        %353 = vmatpush1.msra.mxu0 0.0
        %354 = vmatprep.subr.mxu0 0.0
        %355 = vmatpush1.msra.mxu0 0.0
        %356 = vmatprep.subr.mxu0 0.0
        %357 = vmatpush1.msra.mxu0 0.0
        %358 = vmatprep.subr.mxu0 0.0
        %359 = vmatpush1.msra.mxu0 0.0
        %360 = vmatprep.subr.mxu0 0.0
        %361 = vmatpush1.msra.mxu0 0.0
        %362 = vmatprep.subr.mxu0 0.0
        %363 = vmatpush1.msra.mxu0 0.0
        %364 = vmatprep.subr.mxu0 0.0
        %365 = vmatpush1.msra.mxu0 0.0
        %366 = vmatprep.subr.mxu0 0.0
        %367 = vmatpush1.msra.mxu0 0.0
        %368 = vmatprep.subr.mxu0 0.0
        %369 = vmatpush1.msra.mxu0 0.0
        %370 = vmatprep.subr.mxu0 0.0
        %371 = vmatpush1.msra.mxu0 0.0
        %372 = vmatprep.subr.mxu0 0.0
        %373 = vmatpush1.msra.mxu0 0.0
        %374 = vmatprep.subr.mxu0 0.0
        %375 = vmatpush1.msra.mxu0 0.0
        %376 = vmatprep.subr.mxu0 0.0
        %377 = vmatpush1.msra.mxu0 0.0
        %378 = vmatprep.subr.mxu0 0.0
        %379 = vmatpush1.msra.mxu0 0.0
        %380 = vmatprep.subr.mxu0 0.0
        %381 = vmatpush1.msra.mxu0 0.0
        %382 = vmatprep.subr.mxu0 0.0
        %383 = vmatpush1.msra.mxu0 0.0
        %384 = vmatprep.subr.mxu0 0.0
        %385 = vmatpush1.msra.mxu0 0.0
        %386 = vmatprep.subr.mxu0 0.0
        %387 = vmatpush1.msra.mxu0 0.0
        %388 = vmatprep.subr.mxu0 0.0
        %389 = vmatpush1.msra.mxu0 0.0
        %390 = vmatprep.subr.mxu0 0.0
        %391 = vmatpush1.msra.mxu0 0.0
        %392 = vmatprep.mubr.f32.mxu0 0.0
        %393 = vmatmul.mubr.f32.gmra.mrb[0].mxu0 %v317
        %v394 = vpop.f32.mrb[0].mxu0
        %v395 = vadd.f32 0.0, %v394
        %v396 = vpop.f32.mrb[0].mxu0
        %397 = vmatprep.mubr.f32.mxu0 0.0
        %398 = vmatmul.mubr.f32.gmra.mrb[0].mxu0 %v320
        %v399 = vpop.f32.mrb[0].mxu0
        %v400 = vadd.f32 0.0, %v399
        %v401 = vpop.f32.mrb[0].mxu0
        %402 = vmatprep.mubr.f32.mxu0 0.0
        %403 = vmatmul.mubr.f32.gmra.mrb[0].mxu0 %v323
        %v404 = vpop.f32.mrb[0].mxu0
        %v405 = vadd.f32 0.0, %v404
        %v406 = vpop.f32.mrb[0].mxu0
        %407 = vmatprep.mubr.f32.mxu0 0.0
        %408 = vmatmul.mubr.f32.gmra.mrb[0].mxu0 %v326
        %v409 = vpop.f32.mrb[0].mxu0
        %v410 = vadd.f32 0.0, %v409
        %v411 = vpop.f32.mrb[0].mxu0
        %412 = vdwg.mxu0
        %vm413 = vcmp.gt.f32.partialorder %v395, 0.0
        %vm414 = vcmp.gt.f32.partialorder %v400, 0.0
        %vm415 = vcmp.gt.f32.partialorder %v405, 0.0
        %vm416 = vcmp.gt.f32.partialorder %v410, 0.0
        %v417 = vsel %vm413, 1, 0
        %v418 = vsel %vm414, 1, 0
        %v419 = vsel %vm415, 1, 0
        %v420 = vsel %vm416, 1, 0
        %v421 = vcvt.s32.f32 %v417
        %v422 = vcvt.s32.f32 %v418
        %v423 = vcvt.s32.f32 %v419
        %v424 = vcvt.s32.f32 %v420
        %vm425 = vcmask 261120
        %426 = vst.msk [vmem:[%s207] sm:$0xff] %vm425, %v421
        %427 = vst.msk [vmem:[%s207 + $0x8] sm:$0xff] %vm425, %v422
        %428 = vst.msk [vmem:[%s207 + $0x10] sm:$0xff] %vm425, %v423
        %429 = vst.msk [vmem:[%s207 + $0x18] sm:$0xff] %vm425, %v424
        %s430 = scalar_lea.vmem %s185, 16 [#allocation2]
        %v431 = vld [vmem:[%s430] sm:$0xff]
        %v432 = vld [vmem:[%s430 + $0x8] sm:$0xff]
        %433 = vmatprep.subr.mxu0 0.0
        %434 = vmatpush1.msra.mxu0 %v431
        %435 = vmatprep.subr.mxu0 0.0
        %436 = vmatpush1.msra.mxu0 %v432
        %437 = vmatprep.subr.mxu0 0.0
        %438 = vmatpush1.msra.mxu0 0.0
        %439 = vmatprep.subr.mxu0 0.0
        %440 = vmatpush1.msra.mxu0 0.0
        %441 = vmatprep.subr.mxu0 0.0
        %442 = vmatpush1.msra.mxu0 0.0
        %443 = vmatprep.subr.mxu0 0.0
        %444 = vmatpush1.msra.mxu0 0.0
        %445 = vmatprep.subr.mxu0 0.0
        %446 = vmatpush1.msra.mxu0 0.0
        %447 = vmatprep.subr.mxu0 0.0
        %448 = vmatpush1.msra.mxu0 0.0
        %449 = vmatprep.subr.mxu0 0.0
        %450 = vmatpush1.msra.mxu0 0.0
        %451 = vmatprep.subr.mxu0 0.0
        %452 = vmatpush1.msra.mxu0 0.0
        %453 = vmatprep.subr.mxu0 0.0
        %454 = vmatpush1.msra.mxu0 0.0
        %455 = vmatprep.subr.mxu0 0.0
        %456 = vmatpush1.msra.mxu0 0.0
        %457 = vmatprep.subr.mxu0 0.0
        %458 = vmatpush1.msra.mxu0 0.0
        %459 = vmatprep.subr.mxu0 0.0
        %460 = vmatpush1.msra.mxu0 0.0
        %461 = vmatprep.subr.mxu0 0.0
        %462 = vmatpush1.msra.mxu0 0.0
        %463 = vmatprep.subr.mxu0 0.0
        %464 = vmatpush1.msra.mxu0 0.0
        %465 = vmatprep.subr.mxu0 0.0
        %466 = vmatpush1.msra.mxu0 0.0
        %467 = vmatprep.subr.mxu0 0.0
        %468 = vmatpush1.msra.mxu0 0.0
        %469 = vmatprep.subr.mxu0 0.0
        %470 = vmatpush1.msra.mxu0 0.0
        %471 = vmatprep.subr.mxu0 0.0
        %472 = vmatpush1.msra.mxu0 0.0
        %473 = vmatprep.subr.mxu0 0.0
        %474 = vmatpush1.msra.mxu0 0.0
        %475 = vmatprep.subr.mxu0 0.0
        %476 = vmatpush1.msra.mxu0 0.0
        %477 = vmatprep.subr.mxu0 0.0
        %478 = vmatpush1.msra.mxu0 0.0
        %479 = vmatprep.subr.mxu0 0.0
        %480 = vmatpush1.msra.mxu0 0.0
        %481 = vmatprep.subr.mxu0 0.0
        %482 = vmatpush1.msra.mxu0 0.0
        %483 = vmatprep.subr.mxu0 0.0
        %484 = vmatpush1.msra.mxu0 0.0
        %485 = vmatprep.subr.mxu0 0.0
        %486 = vmatpush1.msra.mxu0 0.0
        %487 = vmatprep.subr.mxu0 0.0
        %488 = vmatpush1.msra.mxu0 0.0
        %489 = vmatprep.subr.mxu0 0.0
        %490 = vmatpush1.msra.mxu0 0.0
        %491 = vmatprep.subr.mxu0 0.0
        %492 = vmatpush1.msra.mxu0 0.0
        %493 = vmatprep.subr.mxu0 0.0
        %494 = vmatpush1.msra.mxu0 0.0
        %495 = vmatprep.subr.mxu0 0.0
        %496 = vmatpush1.msra.mxu0 0.0
        %497 = vmatprep.mubr.f32.mxu0 0.0
        %498 = vmatmul.mubr.f32.gmra.mrb[0].mxu0 %v220
        %v499 = vpop.f32.mrb[0].mxu0
        %v500 = vadd.f32 0.0, %v499
        %v501 = vpop.f32.mrb[0].mxu0
        %502 = vmatprep.mubr.f32.mxu0 0.0
        %503 = vmatmul.mubr.f32.gmra.mrb[0].mxu0 %v223
        %v504 = vpop.f32.mrb[0].mxu0
        %v505 = vadd.f32 0.0, %v504
        %v506 = vpop.f32.mrb[0].mxu0
        %507 = vmatprep.mubr.f32.mxu0 0.0
        %508 = vmatmul.mubr.f32.gmra.mrb[0].mxu0 %v226
        %v509 = vpop.f32.mrb[0].mxu0
        %v510 = vadd.f32 0.0, %v509
        %v511 = vpop.f32.mrb[0].mxu0
        %512 = vmatprep.mubr.f32.mxu0 0.0
        %513 = vmatmul.mubr.f32.gmra.mrb[0].mxu0 %v229
        %v514 = vpop.f32.mrb[0].mxu0
        %v515 = vadd.f32 0.0, %v514
        %v516 = vpop.f32.mrb[0].mxu0
        %517 = vdwg.mxu0
        %v519 = vsel %vm218, %v500, 0
        %v522 = vsel %vm218, %v505, 0
        %v525 = vsel %vm218, %v510, 0
        %v528 = vsel %vm218, %v515, 0
        %530 = vmatprep.subr.mxu0 0.0
        %531 = vmatpush1.msra.mxu0 %v214
        %532 = vmatprep.subr.mxu0 0.0
        %533 = vmatpush1.msra.mxu0 %v215
        %534 = vmatprep.subr.mxu0 0.0
        %535 = vmatpush1.msra.mxu0 0.0
        %536 = vmatprep.subr.mxu0 0.0
        %537 = vmatpush1.msra.mxu0 0.0
        %538 = vmatprep.subr.mxu0 0.0
        %539 = vmatpush1.msra.mxu0 0.0
        %540 = vmatprep.subr.mxu0 0.0
        %541 = vmatpush1.msra.mxu0 0.0
        %542 = vmatprep.subr.mxu0 0.0
        %543 = vmatpush1.msra.mxu0 0.0
        %544 = vmatprep.subr.mxu0 0.0
        %545 = vmatpush1.msra.mxu0 0.0
        %546 = vmatprep.subr.mxu0 0.0
        %547 = vmatpush1.msra.mxu0 0.0
        %548 = vmatprep.subr.mxu0 0.0
        %549 = vmatpush1.msra.mxu0 0.0
        %550 = vmatprep.subr.mxu0 0.0
        %551 = vmatpush1.msra.mxu0 0.0
        %552 = vmatprep.subr.mxu0 0.0
        %553 = vmatpush1.msra.mxu0 0.0
        %554 = vmatprep.subr.mxu0 0.0
        %555 = vmatpush1.msra.mxu0 0.0
        %556 = vmatprep.subr.mxu0 0.0
        %557 = vmatpush1.msra.mxu0 0.0
        %558 = vmatprep.subr.mxu0 0.0
        %559 = vmatpush1.msra.mxu0 0.0
        %560 = vmatprep.subr.mxu0 0.0
        %561 = vmatpush1.msra.mxu0 0.0
        %562 = vmatprep.subr.mxu0 0.0
        %563 = vmatpush1.msra.mxu0 0.0
        %564 = vmatprep.subr.mxu0 0.0
        %565 = vmatpush1.msra.mxu0 0.0
        %566 = vmatprep.subr.mxu0 0.0
        %567 = vmatpush1.msra.mxu0 0.0
        %568 = vmatprep.subr.mxu0 0.0
        %569 = vmatpush1.msra.mxu0 0.0
        %570 = vmatprep.subr.mxu0 0.0
        %571 = vmatpush1.msra.mxu0 0.0
        %572 = vmatprep.subr.mxu0 0.0
        %573 = vmatpush1.msra.mxu0 0.0
        %574 = vmatprep.subr.mxu0 0.0
        %575 = vmatpush1.msra.mxu0 0.0
        %576 = vmatprep.subr.mxu0 0.0
        %577 = vmatpush1.msra.mxu0 0.0
        %578 = vmatprep.subr.mxu0 0.0
        %579 = vmatpush1.msra.mxu0 0.0
        %580 = vmatprep.subr.mxu0 0.0
        %581 = vmatpush1.msra.mxu0 0.0
        %582 = vmatprep.subr.mxu0 0.0
        %583 = vmatpush1.msra.mxu0 0.0
        %584 = vmatprep.subr.mxu0 0.0
        %585 = vmatpush1.msra.mxu0 0.0
        %586 = vmatprep.subr.mxu0 0.0
        %587 = vmatpush1.msra.mxu0 0.0
        %588 = vmatprep.subr.mxu0 0.0
        %589 = vmatpush1.msra.mxu0 0.0
        %590 = vmatprep.subr.mxu0 0.0
        %591 = vmatpush1.msra.mxu0 0.0
        %592 = vmatprep.subr.mxu0 0.0
        %593 = vmatpush1.msra.mxu0 0.0
        %594 = vmatprep.mubr.f32.mxu0 0.0
        %595 = vmatmul.mubr.f32.gmra.mrb[0].mxu0 %v519
        %v596 = vpop.f32.mrb[0].mxu0
        %v597 = vadd.f32 0.0, %v596
        %v598 = vpop.f32.mrb[0].mxu0
        %599 = vmatprep.mubr.f32.mxu0 0.0
        %600 = vmatmul.mubr.f32.gmra.mrb[0].mxu0 %v522
        %v601 = vpop.f32.mrb[0].mxu0
        %v602 = vadd.f32 0.0, %v601
        %v603 = vpop.f32.mrb[0].mxu0
        %604 = vmatprep.mubr.f32.mxu0 0.0
        %605 = vmatmul.mubr.f32.gmra.mrb[0].mxu0 %v525
        %v606 = vpop.f32.mrb[0].mxu0
        %v607 = vadd.f32 0.0, %v606
        %v608 = vpop.f32.mrb[0].mxu0
        %609 = vmatprep.mubr.f32.mxu0 0.0
        %610 = vmatmul.mubr.f32.gmra.mrb[0].mxu0 %v528
        %v611 = vpop.f32.mrb[0].mxu0
        %v612 = vadd.f32 0.0, %v611
        %v613 = vpop.f32.mrb[0].mxu0
        %614 = vdwg.mxu0
        %vm615 = vcmp.gt.f32.partialorder %v597, 0.0
        %vm616 = vcmp.gt.f32.partialorder %v602, 0.0
        %vm617 = vcmp.gt.f32.partialorder %v607, 0.0
        %vm618 = vcmp.gt.f32.partialorder %v612, 0.0
        %v619 = vsel %vm615, 1, 0
        %v620 = vsel %vm616, 1, 0
        %v621 = vsel %vm617, 1, 0
        %v622 = vsel %vm618, 1, 0
        %v623 = vcvt.s32.f32 %v619
        %v624 = vcvt.s32.f32 %v620
        %v625 = vcvt.s32.f32 %v621
        %v626 = vcvt.s32.f32 %v622
        %s627 = scalar_lea.vmem %s207, 32 [#allocation5]
        %628 = vst.msk [vmem:[%s627] sm:$0xff] %vm425, %v623
        %629 = vst.msk [vmem:[%s627 + $0x8] sm:$0xff] %vm425, %v624
        %630 = vst.msk [vmem:[%s627 + $0x10] sm:$0xff] %vm425, %v625
        %631 = vst.msk [vmem:[%s627 + $0x18] sm:$0xff] %vm425, %v626
        %s632 = scalar_lea.vmem %s185, 32 [#allocation2]
        %v633 = vld [vmem:[%s632] sm:$0xff]
        %v634 = vld [vmem:[%s632 + $0x8] sm:$0xff]
        %635 = vmatprep.subr.mxu0 0.0
        %636 = vmatpush1.msra.mxu0 %v633
        %637 = vmatprep.subr.mxu0 0.0
        %638 = vmatpush1.msra.mxu0 %v634
        %639 = vmatprep.subr.mxu0 0.0
        %640 = vmatpush1.msra.mxu0 0.0
        %641 = vmatprep.subr.mxu0 0.0
        %642 = vmatpush1.msra.mxu0 0.0
        %643 = vmatprep.subr.mxu0 0.0
        %644 = vmatpush1.msra.mxu0 0.0
        %645 = vmatprep.subr.mxu0 0.0
        %646 = vmatpush1.msra.mxu0 0.0
        %647 = vmatprep.subr.mxu0 0.0
        %648 = vmatpush1.msra.mxu0 0.0
        %649 = vmatprep.subr.mxu0 0.0
        %650 = vmatpush1.msra.mxu0 0.0
        %651 = vmatprep.subr.mxu0 0.0
        %652 = vmatpush1.msra.mxu0 0.0
        %653 = vmatprep.subr.mxu0 0.0
        %654 = vmatpush1.msra.mxu0 0.0
        %655 = vmatprep.subr.mxu0 0.0
        %656 = vmatpush1.msra.mxu0 0.0
        %657 = vmatprep.subr.mxu0 0.0
        %658 = vmatpush1.msra.mxu0 0.0
        %659 = vmatprep.subr.mxu0 0.0
        %660 = vmatpush1.msra.mxu0 0.0
        %661 = vmatprep.subr.mxu0 0.0
        %662 = vmatpush1.msra.mxu0 0.0
        %663 = vmatprep.subr.mxu0 0.0
        %664 = vmatpush1.msra.mxu0 0.0
        %665 = vmatprep.subr.mxu0 0.0
        %666 = vmatpush1.msra.mxu0 0.0
        %667 = vmatprep.subr.mxu0 0.0
        %668 = vmatpush1.msra.mxu0 0.0
        %669 = vmatprep.subr.mxu0 0.0
        %670 = vmatpush1.msra.mxu0 0.0
        %671 = vmatprep.subr.mxu0 0.0
        %672 = vmatpush1.msra.mxu0 0.0
        %673 = vmatprep.subr.mxu0 0.0
        %674 = vmatpush1.msra.mxu0 0.0
        %675 = vmatprep.subr.mxu0 0.0
        %676 = vmatpush1.msra.mxu0 0.0
        %677 = vmatprep.subr.mxu0 0.0
        %678 = vmatpush1.msra.mxu0 0.0
        %679 = vmatprep.subr.mxu0 0.0
        %680 = vmatpush1.msra.mxu0 0.0
        %681 = vmatprep.subr.mxu0 0.0
        %682 = vmatpush1.msra.mxu0 0.0
        %683 = vmatprep.subr.mxu0 0.0
        %684 = vmatpush1.msra.mxu0 0.0
        %685 = vmatprep.subr.mxu0 0.0
        %686 = vmatpush1.msra.mxu0 0.0
        %687 = vmatprep.subr.mxu0 0.0
        %688 = vmatpush1.msra.mxu0 0.0
        %689 = vmatprep.subr.mxu0 0.0
        %690 = vmatpush1.msra.mxu0 0.0
        %691 = vmatprep.subr.mxu0 0.0
        %692 = vmatpush1.msra.mxu0 0.0
        %693 = vmatprep.subr.mxu0 0.0
        %694 = vmatpush1.msra.mxu0 0.0
        %695 = vmatprep.subr.mxu0 0.0
        %696 = vmatpush1.msra.mxu0 0.0
        %697 = vmatprep.subr.mxu0 0.0
        %698 = vmatpush1.msra.mxu0 0.0
        %699 = vmatprep.mubr.f32.mxu0 0.0
        %700 = vmatmul.mubr.f32.gmra.mrb[0].mxu0 %v220
        %v701 = vpop.f32.mrb[0].mxu0
        %v702 = vadd.f32 0.0, %v701
        %v703 = vpop.f32.mrb[0].mxu0
        %704 = vmatprep.mubr.f32.mxu0 0.0
        %705 = vmatmul.mubr.f32.gmra.mrb[0].mxu0 %v223
        %v706 = vpop.f32.mrb[0].mxu0
        %v707 = vadd.f32 0.0, %v706
        %v708 = vpop.f32.mrb[0].mxu0
        %709 = vmatprep.mubr.f32.mxu0 0.0
        %710 = vmatmul.mubr.f32.gmra.mrb[0].mxu0 %v226
        %v711 = vpop.f32.mrb[0].mxu0
        %v712 = vadd.f32 0.0, %v711
        %v713 = vpop.f32.mrb[0].mxu0
        %714 = vmatprep.mubr.f32.mxu0 0.0
        %715 = vmatmul.mubr.f32.gmra.mrb[0].mxu0 %v229
        %v716 = vpop.f32.mrb[0].mxu0
        %v717 = vadd.f32 0.0, %v716
        %v718 = vpop.f32.mrb[0].mxu0
        %719 = vdwg.mxu0
        %v721 = vsel %vm218, %v702, 0
        %v724 = vsel %vm218, %v707, 0
        %v727 = vsel %vm218, %v712, 0
        %v730 = vsel %vm218, %v717, 0
        %732 = vmatprep.subr.mxu0 0.0
        %733 = vmatpush1.msra.mxu0 %v214
        %734 = vmatprep.subr.mxu0 0.0
        %735 = vmatpush1.msra.mxu0 %v215
        %736 = vmatprep.subr.mxu0 0.0
        %737 = vmatpush1.msra.mxu0 0.0
        %738 = vmatprep.subr.mxu0 0.0
        %739 = vmatpush1.msra.mxu0 0.0
        %740 = vmatprep.subr.mxu0 0.0
        %741 = vmatpush1.msra.mxu0 0.0
        %742 = vmatprep.subr.mxu0 0.0
        %743 = vmatpush1.msra.mxu0 0.0
        %744 = vmatprep.subr.mxu0 0.0
        %745 = vmatpush1.msra.mxu0 0.0
        %746 = vmatprep.subr.mxu0 0.0
        %747 = vmatpush1.msra.mxu0 0.0
        %748 = vmatprep.subr.mxu0 0.0
        %749 = vmatpush1.msra.mxu0 0.0
        %750 = vmatprep.subr.mxu0 0.0
        %751 = vmatpush1.msra.mxu0 0.0
        %752 = vmatprep.subr.mxu0 0.0
        %753 = vmatpush1.msra.mxu0 0.0
        %754 = vmatprep.subr.mxu0 0.0
        %755 = vmatpush1.msra.mxu0 0.0
        %756 = vmatprep.subr.mxu0 0.0
        %757 = vmatpush1.msra.mxu0 0.0
        %758 = vmatprep.subr.mxu0 0.0
        %759 = vmatpush1.msra.mxu0 0.0
        %760 = vmatprep.subr.mxu0 0.0
        %761 = vmatpush1.msra.mxu0 0.0
        %762 = vmatprep.subr.mxu0 0.0
        %763 = vmatpush1.msra.mxu0 0.0
        %764 = vmatprep.subr.mxu0 0.0
        %765 = vmatpush1.msra.mxu0 0.0
        %766 = vmatprep.subr.mxu0 0.0
        %767 = vmatpush1.msra.mxu0 0.0
        %768 = vmatprep.subr.mxu0 0.0
        %769 = vmatpush1.msra.mxu0 0.0
        %770 = vmatprep.subr.mxu0 0.0
        %771 = vmatpush1.msra.mxu0 0.0
        %772 = vmatprep.subr.mxu0 0.0
        %773 = vmatpush1.msra.mxu0 0.0
        %774 = vmatprep.subr.mxu0 0.0
        %775 = vmatpush1.msra.mxu0 0.0
        %776 = vmatprep.subr.mxu0 0.0
        %777 = vmatpush1.msra.mxu0 0.0
        %778 = vmatprep.subr.mxu0 0.0
        %779 = vmatpush1.msra.mxu0 0.0
        %780 = vmatprep.subr.mxu0 0.0
        %781 = vmatpush1.msra.mxu0 0.0
        %782 = vmatprep.subr.mxu0 0.0
        %783 = vmatpush1.msra.mxu0 0.0
        %784 = vmatprep.subr.mxu0 0.0
        %785 = vmatpush1.msra.mxu0 0.0
        %786 = vmatprep.subr.mxu0 0.0
        %787 = vmatpush1.msra.mxu0 0.0
        %788 = vmatprep.subr.mxu0 0.0
        %789 = vmatpush1.msra.mxu0 0.0
        %790 = vmatprep.subr.mxu0 0.0
        %791 = vmatpush1.msra.mxu0 0.0
        %792 = vmatprep.subr.mxu0 0.0
        %793 = vmatpush1.msra.mxu0 0.0
        %794 = vmatprep.subr.mxu0 0.0
        %795 = vmatpush1.msra.mxu0 0.0
        %796 = vmatprep.mubr.f32.mxu0 0.0
        %797 = vmatmul.mubr.f32.gmra.mrb[0].mxu0 %v721
        %v798 = vpop.f32.mrb[0].mxu0
        %v799 = vadd.f32 0.0, %v798
        %v800 = vpop.f32.mrb[0].mxu0
        %801 = vmatprep.mubr.f32.mxu0 0.0
        %802 = vmatmul.mubr.f32.gmra.mrb[0].mxu0 %v724
        %v803 = vpop.f32.mrb[0].mxu0
        %v804 = vadd.f32 0.0, %v803
        %v805 = vpop.f32.mrb[0].mxu0
        %806 = vmatprep.mubr.f32.mxu0 0.0
        %807 = vmatmul.mubr.f32.gmra.mrb[0].mxu0 %v727
        %v808 = vpop.f32.mrb[0].mxu0
        %v809 = vadd.f32 0.0, %v808
        %v810 = vpop.f32.mrb[0].mxu0
        %811 = vmatprep.mubr.f32.mxu0 0.0
        %812 = vmatmul.mubr.f32.gmra.mrb[0].mxu0 %v730
        %v813 = vpop.f32.mrb[0].mxu0
        %v814 = vadd.f32 0.0, %v813
        %v815 = vpop.f32.mrb[0].mxu0
        %816 = vdwg.mxu0
        %vm817 = vcmp.gt.f32.partialorder %v799, 0.0
        %vm818 = vcmp.gt.f32.partialorder %v804, 0.0
        %vm819 = vcmp.gt.f32.partialorder %v809, 0.0
        %vm820 = vcmp.gt.f32.partialorder %v814, 0.0
        %v821 = vsel %vm817, 1, 0
        %v822 = vsel %vm818, 1, 0
        %v823 = vsel %vm819, 1, 0
        %v824 = vsel %vm820, 1, 0
        %v825 = vcvt.s32.f32 %v821
        %v826 = vcvt.s32.f32 %v822
        %v827 = vcvt.s32.f32 %v823
        %v828 = vcvt.s32.f32 %v824
        %s829 = scalar_lea.vmem %s207, 64 [#allocation5]
        %830 = vst.msk [vmem:[%s829] sm:$0xff] %vm425, %v825
        %831 = vst.msk [vmem:[%s829 + $0x8] sm:$0xff] %vm425, %v826
        %832 = vst.msk [vmem:[%s829 + $0x10] sm:$0xff] %vm425, %v827
        %833 = vst.msk [vmem:[%s829 + $0x18] sm:$0xff] %vm425, %v828
        %s834 = scalar_lea.vmem %s185, 48 [#allocation2]
        %v835 = vld [vmem:[%s834] sm:$0xff]
        %v836 = vld [vmem:[%s834 + $0x8] sm:$0xff]
        %837 = vmatprep.subr.mxu0 0.0
        %838 = vmatpush1.msra.mxu0 %v835
        %839 = vmatprep.subr.mxu0 0.0
        %840 = vmatpush1.msra.mxu0 %v836
        %841 = vmatprep.subr.mxu0 0.0
        %842 = vmatpush1.msra.mxu0 0.0
        %843 = vmatprep.subr.mxu0 0.0
        %844 = vmatpush1.msra.mxu0 0.0
        %845 = vmatprep.subr.mxu0 0.0
        %846 = vmatpush1.msra.mxu0 0.0
        %847 = vmatprep.subr.mxu0 0.0
        %848 = vmatpush1.msra.mxu0 0.0
        %849 = vmatprep.subr.mxu0 0.0
        %850 = vmatpush1.msra.mxu0 0.0
        %851 = vmatprep.subr.mxu0 0.0
        %852 = vmatpush1.msra.mxu0 0.0
        %853 = vmatprep.subr.mxu0 0.0
        %854 = vmatpush1.msra.mxu0 0.0
        %855 = vmatprep.subr.mxu0 0.0
        %856 = vmatpush1.msra.mxu0 0.0
        %857 = vmatprep.subr.mxu0 0.0
        %858 = vmatpush1.msra.mxu0 0.0
        %859 = vmatprep.subr.mxu0 0.0
        %860 = vmatpush1.msra.mxu0 0.0
        %861 = vmatprep.subr.mxu0 0.0
        %862 = vmatpush1.msra.mxu0 0.0
        %863 = vmatprep.subr.mxu0 0.0
        %864 = vmatpush1.msra.mxu0 0.0
        %865 = vmatprep.subr.mxu0 0.0
        %866 = vmatpush1.msra.mxu0 0.0
        %867 = vmatprep.subr.mxu0 0.0
        %868 = vmatpush1.msra.mxu0 0.0
        %869 = vmatprep.subr.mxu0 0.0
        %870 = vmatpush1.msra.mxu0 0.0
        %871 = vmatprep.subr.mxu0 0.0
        %872 = vmatpush1.msra.mxu0 0.0
        %873 = vmatprep.subr.mxu0 0.0
        %874 = vmatpush1.msra.mxu0 0.0
        %875 = vmatprep.subr.mxu0 0.0
        %876 = vmatpush1.msra.mxu0 0.0
        %877 = vmatprep.subr.mxu0 0.0
        %878 = vmatpush1.msra.mxu0 0.0
        %879 = vmatprep.subr.mxu0 0.0
        %880 = vmatpush1.msra.mxu0 0.0
        %881 = vmatprep.subr.mxu0 0.0
        %882 = vmatpush1.msra.mxu0 0.0
        %883 = vmatprep.subr.mxu0 0.0
        %884 = vmatpush1.msra.mxu0 0.0
        %885 = vmatprep.subr.mxu0 0.0
        %886 = vmatpush1.msra.mxu0 0.0
        %887 = vmatprep.subr.mxu0 0.0
        %888 = vmatpush1.msra.mxu0 0.0
        %889 = vmatprep.subr.mxu0 0.0
        %890 = vmatpush1.msra.mxu0 0.0
        %891 = vmatprep.subr.mxu0 0.0
        %892 = vmatpush1.msra.mxu0 0.0
        %893 = vmatprep.subr.mxu0 0.0
        %894 = vmatpush1.msra.mxu0 0.0
        %895 = vmatprep.subr.mxu0 0.0
        %896 = vmatpush1.msra.mxu0 0.0
        %897 = vmatprep.subr.mxu0 0.0
        %898 = vmatpush1.msra.mxu0 0.0
        %899 = vmatprep.subr.mxu0 0.0
        %900 = vmatpush1.msra.mxu0 0.0
        %901 = vmatprep.mubr.f32.mxu0 0.0
        %902 = vmatmul.mubr.f32.gmra.mrb[0].mxu0 %v220
        %v903 = vpop.f32.mrb[0].mxu0
        %v904 = vadd.f32 0.0, %v903
        %v905 = vpop.f32.mrb[0].mxu0
        %906 = vmatprep.mubr.f32.mxu0 0.0
        %907 = vmatmul.mubr.f32.gmra.mrb[0].mxu0 %v223
        %v908 = vpop.f32.mrb[0].mxu0
        %v909 = vadd.f32 0.0, %v908
        %v910 = vpop.f32.mrb[0].mxu0
        %911 = vmatprep.mubr.f32.mxu0 0.0
        %912 = vmatmul.mubr.f32.gmra.mrb[0].mxu0 %v226
        %v913 = vpop.f32.mrb[0].mxu0
        %v914 = vadd.f32 0.0, %v913
        %v915 = vpop.f32.mrb[0].mxu0
        %916 = vmatprep.mubr.f32.mxu0 0.0
        %917 = vmatmul.mubr.f32.gmra.mrb[0].mxu0 %v229
        %v918 = vpop.f32.mrb[0].mxu0
        %v919 = vadd.f32 0.0, %v918
        %v920 = vpop.f32.mrb[0].mxu0
        %921 = vdwg.mxu0
        %v923 = vsel %vm218, %v904, 0
        %v926 = vsel %vm218, %v909, 0
        %v929 = vsel %vm218, %v914, 0
        %v932 = vsel %vm218, %v919, 0
        %934 = vmatprep.subr.mxu0 0.0
        %935 = vmatpush1.msra.mxu0 %v214
        %936 = vmatprep.subr.mxu0 0.0
        %937 = vmatpush1.msra.mxu0 %v215
        %938 = vmatprep.subr.mxu0 0.0
        %939 = vmatpush1.msra.mxu0 0.0
        %940 = vmatprep.subr.mxu0 0.0
        %941 = vmatpush1.msra.mxu0 0.0
        %942 = vmatprep.subr.mxu0 0.0
        %943 = vmatpush1.msra.mxu0 0.0
        %944 = vmatprep.subr.mxu0 0.0
        %945 = vmatpush1.msra.mxu0 0.0
        %946 = vmatprep.subr.mxu0 0.0
        %947 = vmatpush1.msra.mxu0 0.0
        %948 = vmatprep.subr.mxu0 0.0
        %949 = vmatpush1.msra.mxu0 0.0
        %950 = vmatprep.subr.mxu0 0.0
        %951 = vmatpush1.msra.mxu0 0.0
        %952 = vmatprep.subr.mxu0 0.0
        %953 = vmatpush1.msra.mxu0 0.0
        %954 = vmatprep.subr.mxu0 0.0
        %955 = vmatpush1.msra.mxu0 0.0
        %956 = vmatprep.subr.mxu0 0.0
        %957 = vmatpush1.msra.mxu0 0.0
        %958 = vmatprep.subr.mxu0 0.0
        %959 = vmatpush1.msra.mxu0 0.0
        %960 = vmatprep.subr.mxu0 0.0
        %961 = vmatpush1.msra.mxu0 0.0
        %962 = vmatprep.subr.mxu0 0.0
        %963 = vmatpush1.msra.mxu0 0.0
        %964 = vmatprep.subr.mxu0 0.0
        %965 = vmatpush1.msra.mxu0 0.0
        %966 = vmatprep.subr.mxu0 0.0
        %967 = vmatpush1.msra.mxu0 0.0
        %968 = vmatprep.subr.mxu0 0.0
        %969 = vmatpush1.msra.mxu0 0.0
        %970 = vmatprep.subr.mxu0 0.0
        %971 = vmatpush1.msra.mxu0 0.0
        %972 = vmatprep.subr.mxu0 0.0
        %973 = vmatpush1.msra.mxu0 0.0
        %974 = vmatprep.subr.mxu0 0.0
        %975 = vmatpush1.msra.mxu0 0.0
        %976 = vmatprep.subr.mxu0 0.0
        %977 = vmatpush1.msra.mxu0 0.0
        %978 = vmatprep.subr.mxu0 0.0
        %979 = vmatpush1.msra.mxu0 0.0
        %980 = vmatprep.subr.mxu0 0.0
        %981 = vmatpush1.msra.mxu0 0.0
        %982 = vmatprep.subr.mxu0 0.0
        %983 = vmatpush1.msra.mxu0 0.0
        %984 = vmatprep.subr.mxu0 0.0
        %985 = vmatpush1.msra.mxu0 0.0
        %986 = vmatprep.subr.mxu0 0.0
        %987 = vmatpush1.msra.mxu0 0.0
        %988 = vmatprep.subr.mxu0 0.0
        %989 = vmatpush1.msra.mxu0 0.0
        %990 = vmatprep.subr.mxu0 0.0
        %991 = vmatpush1.msra.mxu0 0.0
        %992 = vmatprep.subr.mxu0 0.0
        %993 = vmatpush1.msra.mxu0 0.0
        %994 = vmatprep.subr.mxu0 0.0
        %995 = vmatpush1.msra.mxu0 0.0
        %996 = vmatprep.subr.mxu0 0.0
        %997 = vmatpush1.msra.mxu0 0.0
        %998 = vmatprep.mubr.f32.mxu0 0.0
        %999 = vmatmul.mubr.f32.gmra.mrb[0].mxu0 %v923
        %v1000 = vpop.f32.mrb[0].mxu0
        %v1001 = vadd.f32 0.0, %v1000
        %v1002 = vpop.f32.mrb[0].mxu0
        %1003 = vmatprep.mubr.f32.mxu0 0.0
        %1004 = vmatmul.mubr.f32.gmra.mrb[0].mxu0 %v926
        %v1005 = vpop.f32.mrb[0].mxu0
        %v1006 = vadd.f32 0.0, %v1005
        %v1007 = vpop.f32.mrb[0].mxu0
        %1008 = vmatprep.mubr.f32.mxu0 0.0
        %1009 = vmatmul.mubr.f32.gmra.mrb[0].mxu0 %v929
        %v1010 = vpop.f32.mrb[0].mxu0
        %v1011 = vadd.f32 0.0, %v1010
        %v1012 = vpop.f32.mrb[0].mxu0
        %1013 = vmatprep.mubr.f32.mxu0 0.0
        %1014 = vmatmul.mubr.f32.gmra.mrb[0].mxu0 %v932
        %v1015 = vpop.f32.mrb[0].mxu0
        %v1016 = vadd.f32 0.0, %v1015
        %v1017 = vpop.f32.mrb[0].mxu0
        %1018 = vdwg.mxu0
        %vm1019 = vcmp.gt.f32.partialorder %v1001, 0.0
        %vm1020 = vcmp.gt.f32.partialorder %v1006, 0.0
        %vm1021 = vcmp.gt.f32.partialorder %v1011, 0.0
        %vm1022 = vcmp.gt.f32.partialorder %v1016, 0.0
        %v1023 = vsel %vm1019, 1, 0
        %v1024 = vsel %vm1020, 1, 0
        %v1025 = vsel %vm1021, 1, 0
        %v1026 = vsel %vm1022, 1, 0
        %v1027 = vcvt.s32.f32 %v1023
        %v1028 = vcvt.s32.f32 %v1024
        %v1029 = vcvt.s32.f32 %v1025
        %v1030 = vcvt.s32.f32 %v1026
        %s1031 = scalar_lea.vmem %s207, 96 [#allocation5]
        %1032 = vst.msk [vmem:[%s1031] sm:$0xff] %vm425, %v1027
        %1033 = vst.msk [vmem:[%s1031 + $0x8] sm:$0xff] %vm425, %v1028
        %1034 = vst.msk [vmem:[%s1031 + $0x10] sm:$0xff] %vm425, %v1029
        %1035 = vst.msk [vmem:[%s1031 + $0x18] sm:$0xff] %vm425, %v1030
        %s1036 = scalar_lea.vmem %s185, 64 [#allocation2]
        %v1037 = vld [vmem:[%s1036] sm:$0xff]
        %v1038 = vld [vmem:[%s1036 + $0x8] sm:$0xff]
        %1039 = vmatprep.subr.mxu0 0.0
        %1040 = vmatpush1.msra.mxu0 %v1037
        %1041 = vmatprep.subr.mxu0 0.0
        %1042 = vmatpush1.msra.mxu0 %v1038
        %1043 = vmatprep.subr.mxu0 0.0
        %1044 = vmatpush1.msra.mxu0 0.0
        %1045 = vmatprep.subr.mxu0 0.0
        %1046 = vmatpush1.msra.mxu0 0.0
        %1047 = vmatprep.subr.mxu0 0.0
        %1048 = vmatpush1.msra.mxu0 0.0
        %1049 = vmatprep.subr.mxu0 0.0
        %1050 = vmatpush1.msra.mxu0 0.0
        %1051 = vmatprep.subr.mxu0 0.0
        %1052 = vmatpush1.msra.mxu0 0.0
        %1053 = vmatprep.subr.mxu0 0.0
        %1054 = vmatpush1.msra.mxu0 0.0
        %1055 = vmatprep.subr.mxu0 0.0
        %1056 = vmatpush1.msra.mxu0 0.0
        %1057 = vmatprep.subr.mxu0 0.0
        %1058 = vmatpush1.msra.mxu0 0.0
        %1059 = vmatprep.subr.mxu0 0.0
        %1060 = vmatpush1.msra.mxu0 0.0
        %1061 = vmatprep.subr.mxu0 0.0
        %1062 = vmatpush1.msra.mxu0 0.0
        %1063 = vmatprep.subr.mxu0 0.0
        %1064 = vmatpush1.msra.mxu0 0.0
        %1065 = vmatprep.subr.mxu0 0.0
        %1066 = vmatpush1.msra.mxu0 0.0
        %1067 = vmatprep.subr.mxu0 0.0
        %1068 = vmatpush1.msra.mxu0 0.0
        %1069 = vmatprep.subr.mxu0 0.0
        %1070 = vmatpush1.msra.mxu0 0.0
        %1071 = vmatprep.subr.mxu0 0.0
        %1072 = vmatpush1.msra.mxu0 0.0
        %1073 = vmatprep.subr.mxu0 0.0
        %1074 = vmatpush1.msra.mxu0 0.0
        %1075 = vmatprep.subr.mxu0 0.0
        %1076 = vmatpush1.msra.mxu0 0.0
        %1077 = vmatprep.subr.mxu0 0.0
        %1078 = vmatpush1.msra.mxu0 0.0
        %1079 = vmatprep.subr.mxu0 0.0
        %1080 = vmatpush1.msra.mxu0 0.0
        %1081 = vmatprep.subr.mxu0 0.0
        %1082 = vmatpush1.msra.mxu0 0.0
        %1083 = vmatprep.subr.mxu0 0.0
        %1084 = vmatpush1.msra.mxu0 0.0
        %1085 = vmatprep.subr.mxu0 0.0
        %1086 = vmatpush1.msra.mxu0 0.0
        %1087 = vmatprep.subr.mxu0 0.0
        %1088 = vmatpush1.msra.mxu0 0.0
        %1089 = vmatprep.subr.mxu0 0.0
        %1090 = vmatpush1.msra.mxu0 0.0
        %1091 = vmatprep.subr.mxu0 0.0
        %1092 = vmatpush1.msra.mxu0 0.0
        %1093 = vmatprep.subr.mxu0 0.0
        %1094 = vmatpush1.msra.mxu0 0.0
        %1095 = vmatprep.subr.mxu0 0.0
        %1096 = vmatpush1.msra.mxu0 0.0
        %1097 = vmatprep.subr.mxu0 0.0
        %1098 = vmatpush1.msra.mxu0 0.0
        %1099 = vmatprep.subr.mxu0 0.0
        %1100 = vmatpush1.msra.mxu0 0.0
        %1101 = vmatprep.subr.mxu0 0.0
        %1102 = vmatpush1.msra.mxu0 0.0
        %1103 = vmatprep.mubr.f32.mxu0 0.0
        %1104 = vmatmul.mubr.f32.gmra.mrb[0].mxu0 %v220
        %v1105 = vpop.f32.mrb[0].mxu0
        %v1106 = vadd.f32 0.0, %v1105
        %v1107 = vpop.f32.mrb[0].mxu0
        %1108 = vmatprep.mubr.f32.mxu0 0.0
        %1109 = vmatmul.mubr.f32.gmra.mrb[0].mxu0 %v223
        %v1110 = vpop.f32.mrb[0].mxu0
        %v1111 = vadd.f32 0.0, %v1110
        %v1112 = vpop.f32.mrb[0].mxu0
        %1113 = vmatprep.mubr.f32.mxu0 0.0
        %1114 = vmatmul.mubr.f32.gmra.mrb[0].mxu0 %v226
        %v1115 = vpop.f32.mrb[0].mxu0
        %v1116 = vadd.f32 0.0, %v1115
        %v1117 = vpop.f32.mrb[0].mxu0
        %1118 = vmatprep.mubr.f32.mxu0 0.0
        %1119 = vmatmul.mubr.f32.gmra.mrb[0].mxu0 %v229
        %v1120 = vpop.f32.mrb[0].mxu0
        %v1121 = vadd.f32 0.0, %v1120
        %v1122 = vpop.f32.mrb[0].mxu0
        %1123 = vdwg.mxu0
        %v1125 = vsel %vm218, %v1106, 0
        %v1128 = vsel %vm218, %v1111, 0
        %v1131 = vsel %vm218, %v1116, 0
        %v1134 = vsel %vm218, %v1121, 0
        %1136 = vmatprep.subr.mxu0 0.0
        %1137 = vmatpush1.msra.mxu0 %v214
        %1138 = vmatprep.subr.mxu0 0.0
        %1139 = vmatpush1.msra.mxu0 %v215
        %1140 = vmatprep.subr.mxu0 0.0
        %1141 = vmatpush1.msra.mxu0 0.0
        %1142 = vmatprep.subr.mxu0 0.0
        %1143 = vmatpush1.msra.mxu0 0.0
        %1144 = vmatprep.subr.mxu0 0.0
        %1145 = vmatpush1.msra.mxu0 0.0
        %1146 = vmatprep.subr.mxu0 0.0
        %1147 = vmatpush1.msra.mxu0 0.0
        %1148 = vmatprep.subr.mxu0 0.0
        %1149 = vmatpush1.msra.mxu0 0.0
        %1150 = vmatprep.subr.mxu0 0.0
        %1151 = vmatpush1.msra.mxu0 0.0
        %1152 = vmatprep.subr.mxu0 0.0
        %1153 = vmatpush1.msra.mxu0 0.0
        %1154 = vmatprep.subr.mxu0 0.0
        %1155 = vmatpush1.msra.mxu0 0.0
        %1156 = vmatprep.subr.mxu0 0.0
        %1157 = vmatpush1.msra.mxu0 0.0
        %1158 = vmatprep.subr.mxu0 0.0
        %1159 = vmatpush1.msra.mxu0 0.0
        %1160 = vmatprep.subr.mxu0 0.0
        %1161 = vmatpush1.msra.mxu0 0.0
        %1162 = vmatprep.subr.mxu0 0.0
        %1163 = vmatpush1.msra.mxu0 0.0
        %1164 = vmatprep.subr.mxu0 0.0
        %1165 = vmatpush1.msra.mxu0 0.0
        %1166 = vmatprep.subr.mxu0 0.0
        %1167 = vmatpush1.msra.mxu0 0.0
        %1168 = vmatprep.subr.mxu0 0.0
        %1169 = vmatpush1.msra.mxu0 0.0
        %1170 = vmatprep.subr.mxu0 0.0
        %1171 = vmatpush1.msra.mxu0 0.0
        %1172 = vmatprep.subr.mxu0 0.0
        %1173 = vmatpush1.msra.mxu0 0.0
        %1174 = vmatprep.subr.mxu0 0.0
        %1175 = vmatpush1.msra.mxu0 0.0
        %1176 = vmatprep.subr.mxu0 0.0
        %1177 = vmatpush1.msra.mxu0 0.0
        %1178 = vmatprep.subr.mxu0 0.0
        %1179 = vmatpush1.msra.mxu0 0.0
        %1180 = vmatprep.subr.mxu0 0.0
        %1181 = vmatpush1.msra.mxu0 0.0
        %1182 = vmatprep.subr.mxu0 0.0
        %1183 = vmatpush1.msra.mxu0 0.0
        %1184 = vmatprep.subr.mxu0 0.0
        %1185 = vmatpush1.msra.mxu0 0.0
        %1186 = vmatprep.subr.mxu0 0.0
        %1187 = vmatpush1.msra.mxu0 0.0
        %1188 = vmatprep.subr.mxu0 0.0
        %1189 = vmatpush1.msra.mxu0 0.0
        %1190 = vmatprep.subr.mxu0 0.0
        %1191 = vmatpush1.msra.mxu0 0.0
        %1192 = vmatprep.subr.mxu0 0.0
        %1193 = vmatpush1.msra.mxu0 0.0
        %1194 = vmatprep.subr.mxu0 0.0
        %1195 = vmatpush1.msra.mxu0 0.0
        %1196 = vmatprep.subr.mxu0 0.0
        %1197 = vmatpush1.msra.mxu0 0.0
        %1198 = vmatprep.subr.mxu0 0.0
        %1199 = vmatpush1.msra.mxu0 0.0
        %1200 = vmatprep.mubr.f32.mxu0 0.0
        %1201 = vmatmul.mubr.f32.gmra.mrb[0].mxu0 %v1125
        %v1202 = vpop.f32.mrb[0].mxu0
        %v1203 = vadd.f32 0.0, %v1202
        %v1204 = vpop.f32.mrb[0].mxu0
        %1205 = vmatprep.mubr.f32.mxu0 0.0
        %1206 = vmatmul.mubr.f32.gmra.mrb[0].mxu0 %v1128
        %v1207 = vpop.f32.mrb[0].mxu0
        %v1208 = vadd.f32 0.0, %v1207
        %v1209 = vpop.f32.mrb[0].mxu0
        %1210 = vmatprep.mubr.f32.mxu0 0.0
        %1211 = vmatmul.mubr.f32.gmra.mrb[0].mxu0 %v1131
        %v1212 = vpop.f32.mrb[0].mxu0
        %v1213 = vadd.f32 0.0, %v1212
        %v1214 = vpop.f32.mrb[0].mxu0
        %1215 = vmatprep.mubr.f32.mxu0 0.0
        %1216 = vmatmul.mubr.f32.gmra.mrb[0].mxu0 %v1134
        %v1217 = vpop.f32.mrb[0].mxu0
        %v1218 = vadd.f32 0.0, %v1217
        %v1219 = vpop.f32.mrb[0].mxu0
        %1220 = vdwg.mxu0
        %vm1221 = vcmp.gt.f32.partialorder %v1203, 0.0
        %vm1222 = vcmp.gt.f32.partialorder %v1208, 0.0
        %vm1223 = vcmp.gt.f32.partialorder %v1213, 0.0
        %vm1224 = vcmp.gt.f32.partialorder %v1218, 0.0
        %v1225 = vsel %vm1221, 1, 0
        %v1226 = vsel %vm1222, 1, 0
        %v1227 = vsel %vm1223, 1, 0
        %v1228 = vsel %vm1224, 1, 0
        %v1229 = vcvt.s32.f32 %v1225
        %v1230 = vcvt.s32.f32 %v1226
        %v1231 = vcvt.s32.f32 %v1227
        %v1232 = vcvt.s32.f32 %v1228
        %s1233 = scalar_lea.vmem %s207, 128 [#allocation5]
        %1234 = vst.msk [vmem:[%s1233] sm:$0xff] %vm425, %v1229
        %1235 = vst.msk [vmem:[%s1233 + $0x8] sm:$0xff] %vm425, %v1230
        %1236 = vst.msk [vmem:[%s1233 + $0x10] sm:$0xff] %vm425, %v1231
        %1237 = vst.msk [vmem:[%s1233 + $0x18] sm:$0xff] %vm425, %v1232
        %s1238 = scalar_lea.vmem %s185, 80 [#allocation2]
        %v1239 = vld [vmem:[%s1238] sm:$0xff]
        %v1240 = vld [vmem:[%s1238 + $0x8] sm:$0xff]
        %1241 = vmatprep.subr.mxu0 0.0
        %1242 = vmatpush1.msra.mxu0 %v1239
        %1243 = vmatprep.subr.mxu0 0.0
        %1244 = vmatpush1.msra.mxu0 %v1240
        %1245 = vmatprep.subr.mxu0 0.0
        %1246 = vmatpush1.msra.mxu0 0.0
        %1247 = vmatprep.subr.mxu0 0.0
        %1248 = vmatpush1.msra.mxu0 0.0
        %1249 = vmatprep.subr.mxu0 0.0
        %1250 = vmatpush1.msra.mxu0 0.0
        %1251 = vmatprep.subr.mxu0 0.0
        %1252 = vmatpush1.msra.mxu0 0.0
        %1253 = vmatprep.subr.mxu0 0.0
        %1254 = vmatpush1.msra.mxu0 0.0
        %1255 = vmatprep.subr.mxu0 0.0
        %1256 = vmatpush1.msra.mxu0 0.0
        %1257 = vmatprep.subr.mxu0 0.0
        %1258 = vmatpush1.msra.mxu0 0.0
        %1259 = vmatprep.subr.mxu0 0.0
        %1260 = vmatpush1.msra.mxu0 0.0
        %1261 = vmatprep.subr.mxu0 0.0
        %1262 = vmatpush1.msra.mxu0 0.0
        %1263 = vmatprep.subr.mxu0 0.0
        %1264 = vmatpush1.msra.mxu0 0.0
        %1265 = vmatprep.subr.mxu0 0.0
        %1266 = vmatpush1.msra.mxu0 0.0
        %1267 = vmatprep.subr.mxu0 0.0
        %1268 = vmatpush1.msra.mxu0 0.0
        %1269 = vmatprep.subr.mxu0 0.0
        %1270 = vmatpush1.msra.mxu0 0.0
        %1271 = vmatprep.subr.mxu0 0.0
        %1272 = vmatpush1.msra.mxu0 0.0
        %1273 = vmatprep.subr.mxu0 0.0
        %1274 = vmatpush1.msra.mxu0 0.0
        %1275 = vmatprep.subr.mxu0 0.0
        %1276 = vmatpush1.msra.mxu0 0.0
        %1277 = vmatprep.subr.mxu0 0.0
        %1278 = vmatpush1.msra.mxu0 0.0
        %1279 = vmatprep.subr.mxu0 0.0
        %1280 = vmatpush1.msra.mxu0 0.0
        %1281 = vmatprep.subr.mxu0 0.0
        %1282 = vmatpush1.msra.mxu0 0.0
        %1283 = vmatprep.subr.mxu0 0.0
        %1284 = vmatpush1.msra.mxu0 0.0
        %1285 = vmatprep.subr.mxu0 0.0
        %1286 = vmatpush1.msra.mxu0 0.0
        %1287 = vmatprep.subr.mxu0 0.0
        %1288 = vmatpush1.msra.mxu0 0.0
        %1289 = vmatprep.subr.mxu0 0.0
        %1290 = vmatpush1.msra.mxu0 0.0
        %1291 = vmatprep.subr.mxu0 0.0
        %1292 = vmatpush1.msra.mxu0 0.0
        %1293 = vmatprep.subr.mxu0 0.0
        %1294 = vmatpush1.msra.mxu0 0.0
        %1295 = vmatprep.subr.mxu0 0.0
        %1296 = vmatpush1.msra.mxu0 0.0
        %1297 = vmatprep.subr.mxu0 0.0
        %1298 = vmatpush1.msra.mxu0 0.0
        %1299 = vmatprep.subr.mxu0 0.0
        %1300 = vmatpush1.msra.mxu0 0.0
        %1301 = vmatprep.subr.mxu0 0.0
        %1302 = vmatpush1.msra.mxu0 0.0
        %1303 = vmatprep.subr.mxu0 0.0
        %1304 = vmatpush1.msra.mxu0 0.0
        %1305 = vmatprep.mubr.f32.mxu0 0.0
        %1306 = vmatmul.mubr.f32.gmra.mrb[0].mxu0 %v220
        %v1307 = vpop.f32.mrb[0].mxu0
        %v1308 = vadd.f32 0.0, %v1307
        %v1309 = vpop.f32.mrb[0].mxu0
        %1310 = vmatprep.mubr.f32.mxu0 0.0
        %1311 = vmatmul.mubr.f32.gmra.mrb[0].mxu0 %v223
        %v1312 = vpop.f32.mrb[0].mxu0
        %v1313 = vadd.f32 0.0, %v1312
        %v1314 = vpop.f32.mrb[0].mxu0
        %1315 = vmatprep.mubr.f32.mxu0 0.0
        %1316 = vmatmul.mubr.f32.gmra.mrb[0].mxu0 %v226
        %v1317 = vpop.f32.mrb[0].mxu0
        %v1318 = vadd.f32 0.0, %v1317
        %v1319 = vpop.f32.mrb[0].mxu0
        %1320 = vmatprep.mubr.f32.mxu0 0.0
        %1321 = vmatmul.mubr.f32.gmra.mrb[0].mxu0 %v229
        %v1322 = vpop.f32.mrb[0].mxu0
        %v1323 = vadd.f32 0.0, %v1322
        %v1324 = vpop.f32.mrb[0].mxu0
        %1325 = vdwg.mxu0
        %v1327 = vsel %vm218, %v1308, 0
        %v1330 = vsel %vm218, %v1313, 0
        %v1333 = vsel %vm218, %v1318, 0
        %v1336 = vsel %vm218, %v1323, 0
        %1338 = vmatprep.subr.mxu0 0.0
        %1339 = vmatpush1.msra.mxu0 %v214
        %1340 = vmatprep.subr.mxu0 0.0
        %1341 = vmatpush1.msra.mxu0 %v215
        %1342 = vmatprep.subr.mxu0 0.0
        %1343 = vmatpush1.msra.mxu0 0.0
        %1344 = vmatprep.subr.mxu0 0.0
        %1345 = vmatpush1.msra.mxu0 0.0
        %1346 = vmatprep.subr.mxu0 0.0
        %1347 = vmatpush1.msra.mxu0 0.0
        %1348 = vmatprep.subr.mxu0 0.0
        %1349 = vmatpush1.msra.mxu0 0.0
        %1350 = vmatprep.subr.mxu0 0.0
        %1351 = vmatpush1.msra.mxu0 0.0
        %1352 = vmatprep.subr.mxu0 0.0
        %1353 = vmatpush1.msra.mxu0 0.0
        %1354 = vmatprep.subr.mxu0 0.0
        %1355 = vmatpush1.msra.mxu0 0.0
        %1356 = vmatprep.subr.mxu0 0.0
        %1357 = vmatpush1.msra.mxu0 0.0
        %1358 = vmatprep.subr.mxu0 0.0
        %1359 = vmatpush1.msra.mxu0 0.0
        %1360 = vmatprep.subr.mxu0 0.0
        %1361 = vmatpush1.msra.mxu0 0.0
        %1362 = vmatprep.subr.mxu0 0.0
        %1363 = vmatpush1.msra.mxu0 0.0
        %1364 = vmatprep.subr.mxu0 0.0
        %1365 = vmatpush1.msra.mxu0 0.0
        %1366 = vmatprep.subr.mxu0 0.0
        %1367 = vmatpush1.msra.mxu0 0.0
        %1368 = vmatprep.subr.mxu0 0.0
        %1369 = vmatpush1.msra.mxu0 0.0
        %1370 = vmatprep.subr.mxu0 0.0
        %1371 = vmatpush1.msra.mxu0 0.0
        %1372 = vmatprep.subr.mxu0 0.0
        %1373 = vmatpush1.msra.mxu0 0.0
        %1374 = vmatprep.subr.mxu0 0.0
        %1375 = vmatpush1.msra.mxu0 0.0
        %1376 = vmatprep.subr.mxu0 0.0
        %1377 = vmatpush1.msra.mxu0 0.0
        %1378 = vmatprep.subr.mxu0 0.0
        %1379 = vmatpush1.msra.mxu0 0.0
        %1380 = vmatprep.subr.mxu0 0.0
        %1381 = vmatpush1.msra.mxu0 0.0
        %1382 = vmatprep.subr.mxu0 0.0
        %1383 = vmatpush1.msra.mxu0 0.0
        %1384 = vmatprep.subr.mxu0 0.0
        %1385 = vmatpush1.msra.mxu0 0.0
        %1386 = vmatprep.subr.mxu0 0.0
        %1387 = vmatpush1.msra.mxu0 0.0
        %1388 = vmatprep.subr.mxu0 0.0
        %1389 = vmatpush1.msra.mxu0 0.0
        %1390 = vmatprep.subr.mxu0 0.0
        %1391 = vmatpush1.msra.mxu0 0.0
        %1392 = vmatprep.subr.mxu0 0.0
        %1393 = vmatpush1.msra.mxu0 0.0
        %1394 = vmatprep.subr.mxu0 0.0
        %1395 = vmatpush1.msra.mxu0 0.0
        %1396 = vmatprep.subr.mxu0 0.0
        %1397 = vmatpush1.msra.mxu0 0.0
        %1398 = vmatprep.subr.mxu0 0.0
        %1399 = vmatpush1.msra.mxu0 0.0
        %1400 = vmatprep.subr.mxu0 0.0
        %1401 = vmatpush1.msra.mxu0 0.0
        %1402 = vmatprep.mubr.f32.mxu0 0.0
        %1403 = vmatmul.mubr.f32.gmra.mrb[0].mxu0 %v1327
        %v1404 = vpop.f32.mrb[0].mxu0
        %v1405 = vadd.f32 0.0, %v1404
        %v1406 = vpop.f32.mrb[0].mxu0
        %1407 = vmatprep.mubr.f32.mxu0 0.0
        %1408 = vmatmul.mubr.f32.gmra.mrb[0].mxu0 %v1330
        %v1409 = vpop.f32.mrb[0].mxu0
        %v1410 = vadd.f32 0.0, %v1409
        %v1411 = vpop.f32.mrb[0].mxu0
        %1412 = vmatprep.mubr.f32.mxu0 0.0
        %1413 = vmatmul.mubr.f32.gmra.mrb[0].mxu0 %v1333
        %v1414 = vpop.f32.mrb[0].mxu0
        %v1415 = vadd.f32 0.0, %v1414
        %v1416 = vpop.f32.mrb[0].mxu0
        %1417 = vmatprep.mubr.f32.mxu0 0.0
        %1418 = vmatmul.mubr.f32.gmra.mrb[0].mxu0 %v1336
        %v1419 = vpop.f32.mrb[0].mxu0
        %v1420 = vadd.f32 0.0, %v1419
        %v1421 = vpop.f32.mrb[0].mxu0
        %1422 = vdwg.mxu0
        %vm1423 = vcmp.gt.f32.partialorder %v1405, 0.0
        %vm1424 = vcmp.gt.f32.partialorder %v1410, 0.0
        %vm1425 = vcmp.gt.f32.partialorder %v1415, 0.0
        %vm1426 = vcmp.gt.f32.partialorder %v1420, 0.0
        %v1427 = vsel %vm1423, 1, 0
        %v1428 = vsel %vm1424, 1, 0
        %v1429 = vsel %vm1425, 1, 0
        %v1430 = vsel %vm1426, 1, 0
        %v1431 = vcvt.s32.f32 %v1427
        %v1432 = vcvt.s32.f32 %v1428
        %v1433 = vcvt.s32.f32 %v1429
        %v1434 = vcvt.s32.f32 %v1430
        %s1435 = scalar_lea.vmem %s207, 160 [#allocation5]
        %1436 = vst.msk [vmem:[%s1435] sm:$0xff] %vm425, %v1431
        %1437 = vst.msk [vmem:[%s1435 + $0x8] sm:$0xff] %vm425, %v1432
        %1438 = vst.msk [vmem:[%s1435 + $0x10] sm:$0xff] %vm425, %v1433
        %1439 = vst.msk [vmem:[%s1435 + $0x18] sm:$0xff] %vm425, %v1434
        %s1440 = scalar_lea.vmem %s185, 96 [#allocation2]
        %v1441 = vld [vmem:[%s1440] sm:$0xff]
        %v1442 = vld [vmem:[%s1440 + $0x8] sm:$0xff]
        %1443 = vmatprep.subr.mxu0 0.0
        %1444 = vmatpush1.msra.mxu0 %v1441
        %1445 = vmatprep.subr.mxu0 0.0
        %1446 = vmatpush1.msra.mxu0 %v1442
        %1447 = vmatprep.subr.mxu0 0.0
        %1448 = vmatpush1.msra.mxu0 0.0
        %1449 = vmatprep.subr.mxu0 0.0
        %1450 = vmatpush1.msra.mxu0 0.0
        %1451 = vmatprep.subr.mxu0 0.0
        %1452 = vmatpush1.msra.mxu0 0.0
        %1453 = vmatprep.subr.mxu0 0.0
        %1454 = vmatpush1.msra.mxu0 0.0
        %1455 = vmatprep.subr.mxu0 0.0
        %1456 = vmatpush1.msra.mxu0 0.0
        %1457 = vmatprep.subr.mxu0 0.0
        %1458 = vmatpush1.msra.mxu0 0.0
        %1459 = vmatprep.subr.mxu0 0.0
        %1460 = vmatpush1.msra.mxu0 0.0
        %1461 = vmatprep.subr.mxu0 0.0
        %1462 = vmatpush1.msra.mxu0 0.0
        %1463 = vmatprep.subr.mxu0 0.0
        %1464 = vmatpush1.msra.mxu0 0.0
        %1465 = vmatprep.subr.mxu0 0.0
        %1466 = vmatpush1.msra.mxu0 0.0
        %1467 = vmatprep.subr.mxu0 0.0
        %1468 = vmatpush1.msra.mxu0 0.0
        %1469 = vmatprep.subr.mxu0 0.0
        %1470 = vmatpush1.msra.mxu0 0.0
        %1471 = vmatprep.subr.mxu0 0.0
        %1472 = vmatpush1.msra.mxu0 0.0
        %1473 = vmatprep.subr.mxu0 0.0
        %1474 = vmatpush1.msra.mxu0 0.0
        %1475 = vmatprep.subr.mxu0 0.0
        %1476 = vmatpush1.msra.mxu0 0.0
        %1477 = vmatprep.subr.mxu0 0.0
        %1478 = vmatpush1.msra.mxu0 0.0
        %1479 = vmatprep.subr.mxu0 0.0
        %1480 = vmatpush1.msra.mxu0 0.0
        %1481 = vmatprep.subr.mxu0 0.0
        %1482 = vmatpush1.msra.mxu0 0.0
        %1483 = vmatprep.subr.mxu0 0.0
        %1484 = vmatpush1.msra.mxu0 0.0
        %1485 = vmatprep.subr.mxu0 0.0
        %1486 = vmatpush1.msra.mxu0 0.0
        %1487 = vmatprep.subr.mxu0 0.0
        %1488 = vmatpush1.msra.mxu0 0.0
        %1489 = vmatprep.subr.mxu0 0.0
        %1490 = vmatpush1.msra.mxu0 0.0
        %1491 = vmatprep.subr.mxu0 0.0
        %1492 = vmatpush1.msra.mxu0 0.0
        %1493 = vmatprep.subr.mxu0 0.0
        %1494 = vmatpush1.msra.mxu0 0.0
        %1495 = vmatprep.subr.mxu0 0.0
        %1496 = vmatpush1.msra.mxu0 0.0
        %1497 = vmatprep.subr.mxu0 0.0
        %1498 = vmatpush1.msra.mxu0 0.0
        %1499 = vmatprep.subr.mxu0 0.0
        %1500 = vmatpush1.msra.mxu0 0.0
        %1501 = vmatprep.subr.mxu0 0.0
        %1502 = vmatpush1.msra.mxu0 0.0
        %1503 = vmatprep.subr.mxu0 0.0
        %1504 = vmatpush1.msra.mxu0 0.0
        %1505 = vmatprep.subr.mxu0 0.0
        %1506 = vmatpush1.msra.mxu0 0.0
        %1507 = vmatprep.mubr.f32.mxu0 0.0
        %1508 = vmatmul.mubr.f32.gmra.mrb[0].mxu0 %v220
        %v1509 = vpop.f32.mrb[0].mxu0
        %v1510 = vadd.f32 0.0, %v1509
        %v1511 = vpop.f32.mrb[0].mxu0
        %1512 = vmatprep.mubr.f32.mxu0 0.0
        %1513 = vmatmul.mubr.f32.gmra.mrb[0].mxu0 %v223
        %v1514 = vpop.f32.mrb[0].mxu0
        %v1515 = vadd.f32 0.0, %v1514
        %v1516 = vpop.f32.mrb[0].mxu0
        %1517 = vmatprep.mubr.f32.mxu0 0.0
        %1518 = vmatmul.mubr.f32.gmra.mrb[0].mxu0 %v226
        %v1519 = vpop.f32.mrb[0].mxu0
        %v1520 = vadd.f32 0.0, %v1519
        %v1521 = vpop.f32.mrb[0].mxu0
        %1522 = vmatprep.mubr.f32.mxu0 0.0
        %1523 = vmatmul.mubr.f32.gmra.mrb[0].mxu0 %v229
        %v1524 = vpop.f32.mrb[0].mxu0
        %v1525 = vadd.f32 0.0, %v1524
        %v1526 = vpop.f32.mrb[0].mxu0
        %1527 = vdwg.mxu0
        %v1529 = vsel %vm218, %v1510, 0
        %v1532 = vsel %vm218, %v1515, 0
        %v1535 = vsel %vm218, %v1520, 0
        %v1538 = vsel %vm218, %v1525, 0
        %1540 = vmatprep.subr.mxu0 0.0
        %1541 = vmatpush1.msra.mxu0 %v214
        %1542 = vmatprep.subr.mxu0 0.0
        %1543 = vmatpush1.msra.mxu0 %v215
        %1544 = vmatprep.subr.mxu0 0.0
        %1545 = vmatpush1.msra.mxu0 0.0
        %1546 = vmatprep.subr.mxu0 0.0
        %1547 = vmatpush1.msra.mxu0 0.0
        %1548 = vmatprep.subr.mxu0 0.0
        %1549 = vmatpush1.msra.mxu0 0.0
        %1550 = vmatprep.subr.mxu0 0.0
        %1551 = vmatpush1.msra.mxu0 0.0
        %1552 = vmatprep.subr.mxu0 0.0
        %1553 = vmatpush1.msra.mxu0 0.0
        %1554 = vmatprep.subr.mxu0 0.0
        %1555 = vmatpush1.msra.mxu0 0.0
        %1556 = vmatprep.subr.mxu0 0.0
        %1557 = vmatpush1.msra.mxu0 0.0
        %1558 = vmatprep.subr.mxu0 0.0
        %1559 = vmatpush1.msra.mxu0 0.0
        %1560 = vmatprep.subr.mxu0 0.0
        %1561 = vmatpush1.msra.mxu0 0.0
        %1562 = vmatprep.subr.mxu0 0.0
        %1563 = vmatpush1.msra.mxu0 0.0
        %1564 = vmatprep.subr.mxu0 0.0
        %1565 = vmatpush1.msra.mxu0 0.0
        %1566 = vmatprep.subr.mxu0 0.0
        %1567 = vmatpush1.msra.mxu0 0.0
        %1568 = vmatprep.subr.mxu0 0.0
        %1569 = vmatpush1.msra.mxu0 0.0
        %1570 = vmatprep.subr.mxu0 0.0
        %1571 = vmatpush1.msra.mxu0 0.0
        %1572 = vmatprep.subr.mxu0 0.0
        %1573 = vmatpush1.msra.mxu0 0.0
        %1574 = vmatprep.subr.mxu0 0.0
        %1575 = vmatpush1.msra.mxu0 0.0
        %1576 = vmatprep.subr.mxu0 0.0
        %1577 = vmatpush1.msra.mxu0 0.0
        %1578 = vmatprep.subr.mxu0 0.0
        %1579 = vmatpush1.msra.mxu0 0.0
        %1580 = vmatprep.subr.mxu0 0.0
        %1581 = vmatpush1.msra.mxu0 0.0
        %1582 = vmatprep.subr.mxu0 0.0
        %1583 = vmatpush1.msra.mxu0 0.0
        %1584 = vmatprep.subr.mxu0 0.0
        %1585 = vmatpush1.msra.mxu0 0.0
        %1586 = vmatprep.subr.mxu0 0.0
        %1587 = vmatpush1.msra.mxu0 0.0
        %1588 = vmatprep.subr.mxu0 0.0
        %1589 = vmatpush1.msra.mxu0 0.0
        %1590 = vmatprep.subr.mxu0 0.0
        %1591 = vmatpush1.msra.mxu0 0.0
        %1592 = vmatprep.subr.mxu0 0.0
        %1593 = vmatpush1.msra.mxu0 0.0
        %1594 = vmatprep.subr.mxu0 0.0
        %1595 = vmatpush1.msra.mxu0 0.0
        %1596 = vmatprep.subr.mxu0 0.0
        %1597 = vmatpush1.msra.mxu0 0.0
        %1598 = vmatprep.subr.mxu0 0.0
        %1599 = vmatpush1.msra.mxu0 0.0
        %1600 = vmatprep.subr.mxu0 0.0
        %1601 = vmatpush1.msra.mxu0 0.0
        %1602 = vmatprep.subr.mxu0 0.0
        %1603 = vmatpush1.msra.mxu0 0.0
        %1604 = vmatprep.mubr.f32.mxu0 0.0
        %1605 = vmatmul.mubr.f32.gmra.mrb[0].mxu0 %v1529
        %v1606 = vpop.f32.mrb[0].mxu0
        %v1607 = vadd.f32 0.0, %v1606
        %v1608 = vpop.f32.mrb[0].mxu0
        %1609 = vmatprep.mubr.f32.mxu0 0.0
        %1610 = vmatmul.mubr.f32.gmra.mrb[0].mxu0 %v1532
        %v1611 = vpop.f32.mrb[0].mxu0
        %v1612 = vadd.f32 0.0, %v1611
        %v1613 = vpop.f32.mrb[0].mxu0
        %1614 = vmatprep.mubr.f32.mxu0 0.0
        %1615 = vmatmul.mubr.f32.gmra.mrb[0].mxu0 %v1535
        %v1616 = vpop.f32.mrb[0].mxu0
        %v1617 = vadd.f32 0.0, %v1616
        %v1618 = vpop.f32.mrb[0].mxu0
        %1619 = vmatprep.mubr.f32.mxu0 0.0
        %1620 = vmatmul.mubr.f32.gmra.mrb[0].mxu0 %v1538
        %v1621 = vpop.f32.mrb[0].mxu0
        %v1622 = vadd.f32 0.0, %v1621
        %v1623 = vpop.f32.mrb[0].mxu0
        %1624 = vdwg.mxu0
        %vm1625 = vcmp.gt.f32.partialorder %v1607, 0.0
        %vm1626 = vcmp.gt.f32.partialorder %v1612, 0.0
        %vm1627 = vcmp.gt.f32.partialorder %v1617, 0.0
        %vm1628 = vcmp.gt.f32.partialorder %v1622, 0.0
        %v1629 = vsel %vm1625, 1, 0
        %v1630 = vsel %vm1626, 1, 0
        %v1631 = vsel %vm1627, 1, 0
        %v1632 = vsel %vm1628, 1, 0
        %v1633 = vcvt.s32.f32 %v1629
        %v1634 = vcvt.s32.f32 %v1630
        %v1635 = vcvt.s32.f32 %v1631
        %v1636 = vcvt.s32.f32 %v1632
        %s1637 = scalar_lea.vmem %s207, 192 [#allocation5]
        %1638 = vst.msk [vmem:[%s1637] sm:$0xff] %vm425, %v1633
        %1639 = vst.msk [vmem:[%s1637 + $0x8] sm:$0xff] %vm425, %v1634
        %1640 = vst.msk [vmem:[%s1637 + $0x10] sm:$0xff] %vm425, %v1635
        %1641 = vst.msk [vmem:[%s1637 + $0x18] sm:$0xff] %vm425, %v1636
        %s1642 = scalar_lea.vmem %s185, 112 [#allocation2]
        %v1643 = vld [vmem:[%s1642] sm:$0xff]
        %v1644 = vld [vmem:[%s1642 + $0x8] sm:$0xff]
        %1645 = vmatprep.subr.mxu0 0.0
        %1646 = vmatpush1.msra.mxu0 %v1643
        %1647 = vmatprep.subr.mxu0 0.0
        %1648 = vmatpush1.msra.mxu0 %v1644
        %1649 = vmatprep.subr.mxu0 0.0
        %1650 = vmatpush1.msra.mxu0 0.0
        %1651 = vmatprep.subr.mxu0 0.0
        %1652 = vmatpush1.msra.mxu0 0.0
        %1653 = vmatprep.subr.mxu0 0.0
        %1654 = vmatpush1.msra.mxu0 0.0
        %1655 = vmatprep.subr.mxu0 0.0
        %1656 = vmatpush1.msra.mxu0 0.0
        %1657 = vmatprep.subr.mxu0 0.0
        %1658 = vmatpush1.msra.mxu0 0.0
        %1659 = vmatprep.subr.mxu0 0.0
        %1660 = vmatpush1.msra.mxu0 0.0
        %1661 = vmatprep.subr.mxu0 0.0
        %1662 = vmatpush1.msra.mxu0 0.0
        %1663 = vmatprep.subr.mxu0 0.0
        %1664 = vmatpush1.msra.mxu0 0.0
        %1665 = vmatprep.subr.mxu0 0.0
        %1666 = vmatpush1.msra.mxu0 0.0
        %1667 = vmatprep.subr.mxu0 0.0
        %1668 = vmatpush1.msra.mxu0 0.0
        %1669 = vmatprep.subr.mxu0 0.0
        %1670 = vmatpush1.msra.mxu0 0.0
        %1671 = vmatprep.subr.mxu0 0.0
        %1672 = vmatpush1.msra.mxu0 0.0
        %1673 = vmatprep.subr.mxu0 0.0
        %1674 = vmatpush1.msra.mxu0 0.0
        %1675 = vmatprep.subr.mxu0 0.0
        %1676 = vmatpush1.msra.mxu0 0.0
        %1677 = vmatprep.subr.mxu0 0.0
        %1678 = vmatpush1.msra.mxu0 0.0
        %1679 = vmatprep.subr.mxu0 0.0
        %1680 = vmatpush1.msra.mxu0 0.0
        %1681 = vmatprep.subr.mxu0 0.0
        %1682 = vmatpush1.msra.mxu0 0.0
        %1683 = vmatprep.subr.mxu0 0.0
        %1684 = vmatpush1.msra.mxu0 0.0
        %1685 = vmatprep.subr.mxu0 0.0
        %1686 = vmatpush1.msra.mxu0 0.0
        %1687 = vmatprep.subr.mxu0 0.0
        %1688 = vmatpush1.msra.mxu0 0.0
        %1689 = vmatprep.subr.mxu0 0.0
        %1690 = vmatpush1.msra.mxu0 0.0
        %1691 = vmatprep.subr.mxu0 0.0
        %1692 = vmatpush1.msra.mxu0 0.0
        %1693 = vmatprep.subr.mxu0 0.0
        %1694 = vmatpush1.msra.mxu0 0.0
        %1695 = vmatprep.subr.mxu0 0.0
        %1696 = vmatpush1.msra.mxu0 0.0
        %1697 = vmatprep.subr.mxu0 0.0
        %1698 = vmatpush1.msra.mxu0 0.0
        %1699 = vmatprep.subr.mxu0 0.0
        %1700 = vmatpush1.msra.mxu0 0.0
        %1701 = vmatprep.subr.mxu0 0.0
        %1702 = vmatpush1.msra.mxu0 0.0
        %1703 = vmatprep.subr.mxu0 0.0
        %1704 = vmatpush1.msra.mxu0 0.0
        %1705 = vmatprep.subr.mxu0 0.0
        %1706 = vmatpush1.msra.mxu0 0.0
        %1707 = vmatprep.subr.mxu0 0.0
        %1708 = vmatpush1.msra.mxu0 0.0
        %1709 = vmatprep.mubr.f32.mxu0 0.0
        %1710 = vmatmul.mubr.f32.gmra.mrb[0].mxu0 %v220
        %v1711 = vpop.f32.mrb[0].mxu0
        %v1712 = vadd.f32 0.0, %v1711
        %v1713 = vpop.f32.mrb[0].mxu0
        %1714 = vmatprep.mubr.f32.mxu0 0.0
        %1715 = vmatmul.mubr.f32.gmra.mrb[0].mxu0 %v223
        %v1716 = vpop.f32.mrb[0].mxu0
        %v1717 = vadd.f32 0.0, %v1716
        %v1718 = vpop.f32.mrb[0].mxu0
        %1719 = vmatprep.mubr.f32.mxu0 0.0
        %1720 = vmatmul.mubr.f32.gmra.mrb[0].mxu0 %v226
        %v1721 = vpop.f32.mrb[0].mxu0
        %v1722 = vadd.f32 0.0, %v1721
        %v1723 = vpop.f32.mrb[0].mxu0
        %1724 = vmatprep.mubr.f32.mxu0 0.0
        %1725 = vmatmul.mubr.f32.gmra.mrb[0].mxu0 %v229
        %v1726 = vpop.f32.mrb[0].mxu0
        %v1727 = vadd.f32 0.0, %v1726
        %v1728 = vpop.f32.mrb[0].mxu0
        %1729 = vdwg.mxu0
        %v1731 = vsel %vm218, %v1712, 0
        %v1734 = vsel %vm218, %v1717, 0
        %v1737 = vsel %vm218, %v1722, 0
        %v1740 = vsel %vm218, %v1727, 0
        %1742 = vmatprep.subr.mxu0 0.0
        %1743 = vmatpush1.msra.mxu0 %v214
        %1744 = vmatprep.subr.mxu0 0.0
        %1745 = vmatpush1.msra.mxu0 %v215
        %1746 = vmatprep.subr.mxu0 0.0
        %1747 = vmatpush1.msra.mxu0 0.0
        %1748 = vmatprep.subr.mxu0 0.0
        %1749 = vmatpush1.msra.mxu0 0.0
        %1750 = vmatprep.subr.mxu0 0.0
        %1751 = vmatpush1.msra.mxu0 0.0
        %1752 = vmatprep.subr.mxu0 0.0
        %1753 = vmatpush1.msra.mxu0 0.0
        %1754 = vmatprep.subr.mxu0 0.0
        %1755 = vmatpush1.msra.mxu0 0.0
        %1756 = vmatprep.subr.mxu0 0.0
        %1757 = vmatpush1.msra.mxu0 0.0
        %1758 = vmatprep.subr.mxu0 0.0
        %1759 = vmatpush1.msra.mxu0 0.0
        %1760 = vmatprep.subr.mxu0 0.0
        %1761 = vmatpush1.msra.mxu0 0.0
        %1762 = vmatprep.subr.mxu0 0.0
        %1763 = vmatpush1.msra.mxu0 0.0
        %1764 = vmatprep.subr.mxu0 0.0
        %1765 = vmatpush1.msra.mxu0 0.0
        %1766 = vmatprep.subr.mxu0 0.0
        %1767 = vmatpush1.msra.mxu0 0.0
        %1768 = vmatprep.subr.mxu0 0.0
        %1769 = vmatpush1.msra.mxu0 0.0
        %1770 = vmatprep.subr.mxu0 0.0
        %1771 = vmatpush1.msra.mxu0 0.0
        %1772 = vmatprep.subr.mxu0 0.0
        %1773 = vmatpush1.msra.mxu0 0.0
        %1774 = vmatprep.subr.mxu0 0.0
        %1775 = vmatpush1.msra.mxu0 0.0
        %1776 = vmatprep.subr.mxu0 0.0
        %1777 = vmatpush1.msra.mxu0 0.0
        %1778 = vmatprep.subr.mxu0 0.0
        %1779 = vmatpush1.msra.mxu0 0.0
        %1780 = vmatprep.subr.mxu0 0.0
        %1781 = vmatpush1.msra.mxu0 0.0
        %1782 = vmatprep.subr.mxu0 0.0
        %1783 = vmatpush1.msra.mxu0 0.0
        %1784 = vmatprep.subr.mxu0 0.0
        %1785 = vmatpush1.msra.mxu0 0.0
        %1786 = vmatprep.subr.mxu0 0.0
        %1787 = vmatpush1.msra.mxu0 0.0
        %1788 = vmatprep.subr.mxu0 0.0
        %1789 = vmatpush1.msra.mxu0 0.0
        %1790 = vmatprep.subr.mxu0 0.0
        %1791 = vmatpush1.msra.mxu0 0.0
        %1792 = vmatprep.subr.mxu0 0.0
        %1793 = vmatpush1.msra.mxu0 0.0
        %1794 = vmatprep.subr.mxu0 0.0
        %1795 = vmatpush1.msra.mxu0 0.0
        %1796 = vmatprep.subr.mxu0 0.0
        %1797 = vmatpush1.msra.mxu0 0.0
        %1798 = vmatprep.subr.mxu0 0.0
        %1799 = vmatpush1.msra.mxu0 0.0
        %1800 = vmatprep.subr.mxu0 0.0
        %1801 = vmatpush1.msra.mxu0 0.0
        %1802 = vmatprep.subr.mxu0 0.0
        %1803 = vmatpush1.msra.mxu0 0.0
        %1804 = vmatprep.subr.mxu0 0.0
        %1805 = vmatpush1.msra.mxu0 0.0
        %1806 = vmatprep.mubr.f32.mxu0 0.0
        %1807 = vmatmul.mubr.f32.gmra.mrb[0].mxu0 %v1731
        %v1808 = vpop.f32.mrb[0].mxu0
        %v1809 = vadd.f32 0.0, %v1808
        %v1810 = vpop.f32.mrb[0].mxu0
        %1811 = vmatprep.mubr.f32.mxu0 0.0
        %1812 = vmatmul.mubr.f32.gmra.mrb[0].mxu0 %v1734
        %v1813 = vpop.f32.mrb[0].mxu0
        %v1814 = vadd.f32 0.0, %v1813
        %v1815 = vpop.f32.mrb[0].mxu0
        %1816 = vmatprep.mubr.f32.mxu0 0.0
        %1817 = vmatmul.mubr.f32.gmra.mrb[0].mxu0 %v1737
        %v1818 = vpop.f32.mrb[0].mxu0
        %v1819 = vadd.f32 0.0, %v1818
        %v1820 = vpop.f32.mrb[0].mxu0
        %1821 = vmatprep.mubr.f32.mxu0 0.0
        %1822 = vmatmul.mubr.f32.gmra.mrb[0].mxu0 %v1740
        %v1823 = vpop.f32.mrb[0].mxu0
        %v1824 = vadd.f32 0.0, %v1823
        %v1825 = vpop.f32.mrb[0].mxu0
        %1826 = vdwg.mxu0
        %vm1827 = vcmp.gt.f32.partialorder %v1809, 0.0
        %vm1828 = vcmp.gt.f32.partialorder %v1814, 0.0
        %vm1829 = vcmp.gt.f32.partialorder %v1819, 0.0
        %vm1830 = vcmp.gt.f32.partialorder %v1824, 0.0
        %v1831 = vsel %vm1827, 1, 0
        %v1832 = vsel %vm1828, 1, 0
        %v1833 = vsel %vm1829, 1, 0
        %v1834 = vsel %vm1830, 1, 0
        %v1835 = vcvt.s32.f32 %v1831
        %v1836 = vcvt.s32.f32 %v1832
        %v1837 = vcvt.s32.f32 %v1833
        %v1838 = vcvt.s32.f32 %v1834
        %s1839 = scalar_lea.vmem %s207, 224 [#allocation5]
        %1840 = vst.msk [vmem:[%s1839] sm:$0xff] %vm425, %v1835
        %1841 = vst.msk [vmem:[%s1839 + $0x8] sm:$0xff] %vm425, %v1836
        %1842 = vst.msk [vmem:[%s1839 + $0x10] sm:$0xff] %vm425, %v1837
        %1843 = vst.msk [vmem:[%s1839 + $0x18] sm:$0xff] %vm425, %v1838
        %s1844 = sand.u32 %s112, 1
        %s1845 = scalar_lea.sflag [#allocation4], %s1844
        %s1846 = sand.u32 %s112, 1
        %s1847 = smul.addr %s1846, 256
        %s1848 = scalar_lea.vmem [#allocation5], %s1847
        // Predicated region
        $region37: #{tpu_custom_call.1} parent=31 // pred_check
          %p1849 = pneg %p122
        $region38: #{tpu_custom_call.1} parent=31 // pred_check_branch
          %1851 = sbr.rel (%p1849) target = $region40
        $region39: #{tpu_custom_call.1} parent=31 // pred_region
          %s1852 = smul.u32 8, %s25
          %s1854 = ssub.s32 4096, 4096
          %1855 = vsyncadd %s1845, %s1854
          %s1856 = smul.addr %s1852, 4
          %s1857 = smul.addr %s24, 32
          %s1858 = sadd.s32 %s1856, %s1857
          %s1859 = smul.addr %s1858, 128
          %s1860 = scalar_lea.hbm %s3, %s1859
          %s1861 = sshll.u32 %s1848, 4
          %s1862 = int_to_ptr.vmem [resolvable:$true] %s1861
          %1867 = dma.vmem_to_hbm [thread:$0]  %s1862, 4096, %s1860, %s1845, 128, 128, 8
        $region40: #{tpu_custom_call.1} parent=31 // pred_fallthru
          _
      $region32: #{tpu_custom_call.1} parent=5 // pred_fallthru
        _
      %p1868 = scmp.le.s32.totalorder 2, %s15
      // Predicated region
      $region41: #{tpu_custom_call.1} parent=5 // pred_check
        %p1869 = pneg %p1868
      $region42: #{tpu_custom_call.1} parent=5 // pred_check_branch
        %1871 = sbr.rel (%p1869) target = $region44
      $region43: #{tpu_custom_call.1} parent=5 // pred_region
        %s1872 = ssub.s32 %s15, 2
        // Predicated region
        $region45: #{tpu_custom_call.1} parent=43 // pred_check
          %p1873 = pneg %p128
        $region46: #{tpu_custom_call.1} parent=43 // pred_check_branch
          %1875 = sbr.rel (%p1873) target = $region48
        $region47: #{tpu_custom_call.1} parent=43 // pred_region
          %s1876 = sand.u32 %s113, 1
          %s1877 = scalar_lea.sflag [#allocation4], %s1876
          %s1878 = sand.u32 %s113, 1
          %s1879 = smul.addr %s1878, 256
          %s1880 = scalar_lea.vmem [#allocation5], %s1879
          %1881 = dma.done %s1877, 4096
        $region48: #{tpu_custom_call.1} parent=43 // pred_fallthru
          _
      $region44: #{tpu_custom_call.1} parent=5 // pred_fallthru
        _
    $region6: #{tpu_custom_call.1} parent=1 // loop_footer
      %s19 = sadd.s32 1, %s15
    $region7: #{tpu_custom_call.1} parent=1 // loop_footer_branch
      %14 = sbr.rel target = $region3
    $region8: #{tpu_custom_call.1} parent=1 // loop_exit
      _
    %1882 = vsyncpa [#allocation3], 1
    %s1883 = scalar_lea.sflag [#allocation3], 1
    %1884 = vsyncpa %s1883, 1
    %1885 = vsyncpa [#allocation4], 1
    %s1886 = scalar_lea.sflag [#allocation4], 1
    %1887 = vsyncpa %s1886, 1

</llo_original>
